<compile_context>
chip_gen: v7x
topology: tpu7x:2x2x1
jax: 0.10.0
libtpu: 0.0.40
codegen_flags: <defaults>
</compile_context>

<pallas_src>
import functools
import math

import jax
import jax.numpy as jnp
import numpy as np
from jax.experimental import pallas as pl
from jax.experimental.pallas import tpu as pltpu


# ----------------------------- Pallas kernel ------------------------------ #

def _layernorm(x, gamma, beta, eps, dim):
    # torch: gamma * (x - mean) / (std + eps) + beta, std unbiased (N-1)
    mean = jnp.mean(x, axis=-1, keepdims=True)
    centered = x - mean
    var = jnp.sum(centered * centered, axis=-1, keepdims=True) * (1.0 / (dim - 1))
    inv = pl.reciprocal(jnp.sqrt(var) + eps, approx=True)   # (N, 1) on the EUP
    return gamma * (centered * inv) + beta


def encoder_layer_kernel(
    x_ref,
    wqkv_ref, bqkv_ref,
    wo_ref, bo_ref,
    w1_ref, b1_ref, w2_ref, b2_ref,
    g1_ref, be1_ref, g2_ref, be2_ref,
    o_ref,
    *, heads, dim, head_dim, seq, batch_tile, n_chunks, eps, compute_dtype,
):
    n_rows = batch_tile * seq
    # (Bt, S, D) -> (N, D): leading-dim collapse only (minor dim untouched).
    x = x_ref[...].reshape(n_rows, dim)

    # Hoisted parameter loads (outside all loops).
    g1 = g1_ref[...]
    be1 = be1_ref[...]
    g2 = g2_ref[...]
    be2 = be2_ref[...]
    bqkv = bqkv_ref[...]
    bo = bo_ref[...]
    b2 = b2_ref[...]

    # ---------------- pre-LN #1 + fused QKV projection --------------------
    ln1 = _layernorm(x, g1, be1, eps, dim).astype(compute_dtype)
    qkv = jnp.dot(ln1, wqkv_ref[...],
                  preferred_element_type=jnp.float32) + bqkv          # (N, 3D)

    # Head split via static lane slices + leading-axis concat (Mosaic-safe:
    # no minor-dim reshapes / 4D transposes).  Result index = h*Bt + b.
    def stack_heads(col0):
        parts = []
        for h in range(heads):
            lo = col0 + h * head_dim
            parts.append(
                qkv[:, lo:lo + head_dim].reshape(batch_tile, seq, head_dim))
        return jnp.concatenate(parts, axis=0)          # (H*Bt, S, hd)

    qh = stack_heads(0).astype(compute_dtype)
    kh = stack_heads(dim).astype(compute_dtype)
    vh = stack_heads(2 * dim).astype(compute_dtype)

    # One batched score matmul + ONE softmax pass over all heads.
    s = jnp.einsum('bqd,bkd->bqk', qh, kh,
                   preferred_element_type=jnp.float32)                 # (H*Bt,S,S)
    s = s - jnp.max(s, axis=-1, keepdims=True)
    p = jnp.exp(s)
    p = p * pl.reciprocal(jnp.sum(p, axis=-1, keepdims=True), approx=True)
    ctx = jnp.einsum('bqk,bkd->bqd', p.astype(compute_dtype), vh,
                     preferred_element_type=jnp.float32)               # (H*Bt,S,hd)

    # Re-concatenate heads on the lane axis -> (N, D); output projection is a
    # single matmul with K = D instead of H matmuls with K = hd.
    ctx_rows = jnp.concatenate(
        [ctx[h * batch_tile:(h + 1) * batch_tile].reshape(n_rows, head_dim)
         for h in range(heads)], axis=-1)
    attn = jnp.dot(ctx_rows.astype(compute_dtype), wo_ref[...],
                   preferred_element_type=jnp.float32)

    x1 = x + attn + bo                                  # residual #1

    # ---------------- pre-LN #2 + chunked feed-forward ---------------------
    ln2 = _layernorm(x1, g2, be2, eps, dim).astype(compute_dtype)

    def ffn_body(c, acc):
        h = jnp.dot(ln2, w1_ref[c], preferred_element_type=jnp.float32) + b1_ref[c]
        h = jnp.maximum(h, 0.0).astype(compute_dtype)                  # ReLU in f32
        return acc + jnp.dot(h, w2_ref[c], preferred_element_type=jnp.float32)

    ffn = jax.lax.fori_loop(0, n_chunks, ffn_body,
                            jnp.zeros((n_rows, dim), jnp.float32), unroll=True)

    out = (x1 + ffn + b2).astype(o_ref.dtype)           # residual #2, (N, D)

    # Lane-dense writeback: fill the flat (1, 1, N*D) VMEM block row by row
    # with static lane slices; the HBM DMA of this block is then a dense,
    # >=128-lane store instead of D-wide masked partial stores.
    for n in range(n_rows):
        o_ref[0, :, n * dim:(n + 1) * dim] = out[n:n + 1, :]


# ------------------------------ wrapper ----------------------------------- #

def encoder_layer(x, params, *, heads, eps=1e-6, compute_dtype=jnp.bfloat16):
    (wq, bq, wk, bk, wv, bv, wo, bo, w1, b1, w2, b2, g1, be1, g2, be2) = params
    B, S, D = x.shape
    assert D % heads == 0
    hd = D // heads
    hidden = w1.shape[1]
    scale = 1.0 / math.sqrt(hd)

    # Batch tiling: at least two grid steps when B is even (one per v7x
    # TensorCore via the "parallel" axis) while amortizing per-step overhead.
    bt = B // 2 if (B % 2 == 0 and B >= 2) else B
    grid_n = B // bt
    n_rows = bt * S

    # ---- wrapper-side weight preprocessing (trace-time, free at runtime) ----
    # Fused QKV weight, 1/sqrt(hd) folded into the Q block; biases stay f32.
    wqkv = jnp.concatenate([wq * scale, wk, wv], axis=1).astype(compute_dtype)
    bqkv = jnp.concatenate([bq * scale, bk, bv], axis=1)
    wo_c = wo.astype(compute_dtype)

    # FFN hidden-dim chunks laid out on a leading axis so the kernel only
    # indexes the leading dim of W1/W2 (no in-kernel lane slicing of weights).
    chunk = 512 if (hidden > 512 and hidden % 512 == 0) else hidden
    n_chunks = hidden // chunk
    w1_r = jnp.transpose(w1.reshape(D, n_chunks, chunk), (1, 0, 2)).astype(compute_dtype)
    b1_r = jnp.transpose(b1.reshape(1, n_chunks, chunk), (1, 0, 2))
    w2_r = w2.reshape(n_chunks, chunk, D).astype(compute_dtype)

    kern_inputs = (x, wqkv, bqkv, wo_c, bo, w1_r, b1_r, w2_r, b2,
                   g1, be1, g2, be2)

    # ---- VMEM budget hint derived from the actual hardware ----
    def _nbytes(a):
        return int(np.prod(a.shape)) * jnp.dtype(a.dtype).itemsize

    weight_bytes = sum(_nbytes(a) for a in kern_inputs[1:])
    act_bytes = 2 * 2 * (n_rows * D * 4)                 # x / out, double-buffered
    tmp_bytes = (n_rows * 3 * D + 3 * heads * n_rows * hd
                 + 2 * heads * bt * S * S + 6 * n_rows * D
                 + 2 * n_rows * chunk) * 4
    est = 2 * weight_bytes + act_bytes + tmp_bytes
    try:
        vmem_cap = int(pltpu.get_tpu_info().vmem_capacity_bytes)
    except Exception:                                    # fall back conservatively
        vmem_cap = 64 * 1024 * 1024
    # <= 48 MiB on v7x (64 MiB physical), can grow toward ~96 MiB on v5e/v6e.
    vmem_limit = int(min(max(est, 32 * 1024 * 1024), (vmem_cap * 3) // 4))

    const2 = lambda g: (0, 0)
    const3 = lambda g: (0, 0, 0)
    row_D = pl.BlockSpec((1, D), const2)

    kernel = functools.partial(
        encoder_layer_kernel,
        heads=heads, dim=D, head_dim=hd, seq=S, batch_tile=bt,
        n_chunks=n_chunks, eps=eps, compute_dtype=compute_dtype)

    out_flat = pl.pallas_call(
        kernel,
        out_shape=jax.ShapeDtypeStruct((grid_n, 1, n_rows * D), x.dtype),
        grid_spec=pltpu.PrefetchScalarGridSpec(
            num_scalar_prefetch=0,
            grid=(grid_n,),
            in_specs=[
                pl.BlockSpec((bt, S, D), lambda g: (g, 0, 0)),      # x
                pl.BlockSpec((D, 3 * D), const2),                   # Wqkv (fused)
                pl.BlockSpec((1, 3 * D), const2),                   # bqkv
                pl.BlockSpec((D, D), const2),                       # Wo
                row_D,                                              # bo
                pl.BlockSpec((n_chunks, D, chunk), const3),         # W1 (chunked)
                pl.BlockSpec((n_chunks, 1, chunk), const3),         # b1
                pl.BlockSpec((n_chunks, chunk, D), const3),         # W2 (chunked)
                row_D,                                              # b2
                row_D, row_D,                                       # ln1 gamma/beta
                row_D, row_D,                                       # ln2 gamma/beta
            ],
            out_specs=pl.BlockSpec((1, 1, n_rows * D), lambda g: (g, 0, 0)),
        ),
        compiler_params=pltpu.CompilerParams(
            dimension_semantics=("parallel",),
            vmem_limit_bytes=vmem_limit),
    )(*kern_inputs)

    return out_flat.reshape(B, S, D)


# --------------------------- pure-JAX reference ---------------------------- #

def encoder_layer_ref(x, params, *, heads, eps=1e-6):
    (wq, bq, wk, bk, wv, bv, wo, bo, w1, b1, w2, b2, g1, be1, g2, be2) = params
    B, S, D = x.shape
    hd = D // heads

    def layernorm(v, g, b):
        mean = jnp.mean(v, axis=-1, keepdims=True)
        var = jnp.sum((v - mean) ** 2, axis=-1, keepdims=True) / (D - 1)
        return g * (v - mean) / (jnp.sqrt(var) + eps) + b

    ln = layernorm(x, g1, be1)
    q = ln @ wq + bq
    k = ln @ wk + bk
    v = ln @ wv + bv
    q = q.reshape(B, S, heads, hd).transpose(0, 2, 1, 3)
    k = k.reshape(B, S, heads, hd).transpose(0, 2, 1, 3)
    v = v.reshape(B, S, heads, hd).transpose(0, 2, 1, 3)
    s = jnp.einsum("bhqd,bhkd->bhqk", q, k) / math.sqrt(hd)
    p = jax.nn.softmax(s, axis=-1)
    o = jnp.einsum("bhqk,bhkd->bhqd", p, v)
    o = o.transpose(0, 2, 1, 3).reshape(B, S, D)
    x1 = x + (o @ wo + bo)

    ln2 = layernorm(x1, g2, be2)
    ffn = jnp.maximum(ln2 @ w1 + b1, 0.0) @ w2 + b2
    return x1 + ffn


# --------------------------------- main ------------------------------------ #

if __name__ == "__main__":
    B, S, D, H = 2, 8, 32, 4

    key = jax.random.PRNGKey(0)
    keys = jax.random.split(key, 16)

    def lin(kw, kb, fan_in, fan_out):
        bound = 1.0 / math.sqrt(fan_in)
        w = jax.random.uniform(kw, (fan_in, fan_out), jnp.float32, -bound, bound)
        b = jax.random.uniform(kb, (1, fan_out), jnp.float32, -bound, bound)
        return w, b

    wq, bq = lin(keys[0], keys[1], D, D)
    wk, bk = lin(keys[2], keys[3], D, D)
    wv, bv = lin(keys[4], keys[5], D, D)
    wo, bo = lin(keys[6], keys[7], D, D)
    w1, b1 = lin(keys[8], keys[9], D, 4 * D)
    w2, b2 = lin(keys[10], keys[11], 4 * D, D)
    g1 = jnp.ones((1, D), jnp.float32)
    be1 = jnp.zeros((1, D), jnp.float32)
    g2 = jnp.ones((1, D), jnp.float32)
    be2 = jnp.zeros((1, D), jnp.float32)

    params = (wq, bq, wk, bk, wv, bv, wo, bo, w1, b1, w2, b2, g1, be1, g2, be2)

    x = jax.random.normal(keys[12], (B, S, D), jnp.float32)

    out = encoder_layer(x, params, heads=H)
    out = jax.block_until_ready(out)

    ref = encoder_layer_ref(x, params, heads=H)
    # Tolerance reflects bf16 MXU operands (f32 accumulation) + approx EUP
    # reciprocals in softmax/LayerNorm.
    np.testing.assert_allclose(np.asarray(out), np.asarray(ref),
                               rtol=5e-2, atol=5e-2)

    print("KERNEL_OK")
</pallas_src>

<mosaic_0001>
module attributes {stable_mosaic.version = 11 : i64} {
  func.func @encoder_layer_kernel(%arg0: i32, %arg1: memref<1x8x32xf32, #tpu.memory_space<vmem>>, %arg2: memref<32x96xbf16, #tpu.memory_space<vmem>>, %arg3: memref<1x96xf32, #tpu.memory_space<vmem>>, %arg4: memref<32x32xbf16, #tpu.memory_space<vmem>>, %arg5: memref<1x32xf32, #tpu.memory_space<vmem>>, %arg6: memref<1x32x128xbf16, #tpu.memory_space<vmem>>, %arg7: memref<1x1x128xf32, #tpu.memory_space<vmem>>, %arg8: memref<1x128x32xbf16, #tpu.memory_space<vmem>>, %arg9: memref<1x32xf32, #tpu.memory_space<vmem>>, %arg10: memref<1x32xf32, #tpu.memory_space<vmem>>, %arg11: memref<1x32xf32, #tpu.memory_space<vmem>>, %arg12: memref<1x32xf32, #tpu.memory_space<vmem>>, %arg13: memref<1x32xf32, #tpu.memory_space<vmem>>, %arg14: memref<1x1x256xf32, #tpu.memory_space<vmem>>) attributes {dimension_semantics = [#tpu.dimension_semantics<parallel>], iteration_bounds = array<i64: 2>, scalar_prefetch = 0 : i64, scratch_operands = 0 : i64, tpu.core_type = #tpu.core_type<tc>, window_params = [{transform_indices = @transform_0, window_bounds = array<i64: 1, 8, 32>}, {pipeline_mode = #tpu.pipeline_mode<synchronous>, transform_indices = @transform_1, window_bounds = array<i64: 32, 96>}, {pipeline_mode = #tpu.pipeline_mode<synchronous>, transform_indices = @transform_2, window_bounds = array<i64: 1, 96>}, {pipeline_mode = #tpu.pipeline_mode<synchronous>, transform_indices = @transform_3, window_bounds = array<i64: 32, 32>}, {pipeline_mode = #tpu.pipeline_mode<synchronous>, transform_indices = @transform_4, window_bounds = array<i64: 1, 32>}, {pipeline_mode = #tpu.pipeline_mode<synchronous>, transform_indices = @transform_5, window_bounds = array<i64: 1, 32, 128>}, {pipeline_mode = #tpu.pipeline_mode<synchronous>, transform_indices = @transform_6, window_bounds = array<i64: 1, 1, 128>}, {pipeline_mode = #tpu.pipeline_mode<synchronous>, transform_indices = @transform_7, window_bounds = array<i64: 1, 128, 32>}, {pipeline_mode = #tpu.pipeline_mode<synchronous>, transform_indices = @transform_8, window_bounds = array<i64: 1, 32>}, {pipeline_mode = #tpu.pipeline_mode<synchronous>, transform_indices = @transform_9, window_bounds = array<i64: 1, 32>}, {pipeline_mode = #tpu.pipeline_mode<synchronous>, transform_indices = @transform_10, window_bounds = array<i64: 1, 32>}, {pipeline_mode = #tpu.pipeline_mode<synchronous>, transform_indices = @transform_11, window_bounds = array<i64: 1, 32>}, {pipeline_mode = #tpu.pipeline_mode<synchronous>, transform_indices = @transform_12, window_bounds = array<i64: 1, 32>}, {transform_indices = @transform_13, window_bounds = array<i64: 1, 1, 256>}]} {
    %c0 = arith.constant 0 : index
    %c0_0 = arith.constant 0 : index
    %c0_1 = arith.constant 0 : index
    %0 = vector.load %arg1[%c0, %c0_0, %c0_1] : memref<1x8x32xf32, #tpu.memory_space<vmem>>, vector<1x8x32xf32>
    %1 = vector.shape_cast %0 : vector<1x8x32xf32> to vector<8x32xf32>
    %c0_2 = arith.constant 0 : index
    %c0_3 = arith.constant 0 : index
    %2 = vector.load %arg10[%c0_2, %c0_3] : memref<1x32xf32, #tpu.memory_space<vmem>>, vector<1x32xf32>
    %c0_4 = arith.constant 0 : index
    %c0_5 = arith.constant 0 : index
    %3 = vector.load %arg11[%c0_4, %c0_5] : memref<1x32xf32, #tpu.memory_space<vmem>>, vector<1x32xf32>
    %c0_6 = arith.constant 0 : index
    %c0_7 = arith.constant 0 : index
    %4 = vector.load %arg12[%c0_6, %c0_7] : memref<1x32xf32, #tpu.memory_space<vmem>>, vector<1x32xf32>
    %c0_8 = arith.constant 0 : index
    %c0_9 = arith.constant 0 : index
    %5 = vector.load %arg13[%c0_8, %c0_9] : memref<1x32xf32, #tpu.memory_space<vmem>>, vector<1x32xf32>
    %c0_10 = arith.constant 0 : index
    %c0_11 = arith.constant 0 : index
    %6 = vector.load %arg3[%c0_10, %c0_11] : memref<1x96xf32, #tpu.memory_space<vmem>>, vector<1x96xf32>
    %c0_12 = arith.constant 0 : index
    %c0_13 = arith.constant 0 : index
    %7 = vector.load %arg5[%c0_12, %c0_13] : memref<1x32xf32, #tpu.memory_space<vmem>>, vector<1x32xf32>
    %c0_14 = arith.constant 0 : index
    %c0_15 = arith.constant 0 : index
    %8 = vector.load %arg9[%c0_14, %c0_15] : memref<1x32xf32, #tpu.memory_space<vmem>>, vector<1x32xf32>
    %cst = arith.constant dense<0.000000e+00> : vector<8xf32>
    %9 = vector.multi_reduction <add>, %1, %cst [1] : vector<8x32xf32> to vector<8xf32>
    %10 = vector.shape_cast %9 : vector<8xf32> to vector<8x1xf32>
    %cst_16 = arith.constant 3.200000e+01 : f32
    %11 = vector.broadcast %cst_16 : f32 to vector<8x1xf32>
    %12 = arith.divf %10, %11 : vector<8x1xf32>
    %13 = vector.broadcast %12 : vector<8x1xf32> to vector<8x32xf32>
    %14 = arith.subf %1, %13 : vector<8x32xf32>
    %15 = arith.mulf %14, %14 : vector<8x32xf32>
    %cst_17 = arith.constant dense<0.000000e+00> : vector<8xf32>
    %16 = vector.multi_reduction <add>, %15, %cst_17 [1] : vector<8x32xf32> to vector<8xf32>
    %17 = vector.shape_cast %16 : vector<8xf32> to vector<8x1xf32>
    %cst_18 = arith.constant 0.0322580636 : f32
    %18 = vector.broadcast %cst_18 : f32 to vector<8x1xf32>
    %19 = arith.mulf %17, %18 : vector<8x1xf32>
    %20 = math.sqrt %19 : vector<8x1xf32>
    %cst_19 = arith.constant 9.99999997E-7 : f32
    %21 = vector.broadcast %cst_19 : f32 to vector<8x1xf32>
    %22 = arith.addf %20, %21 : vector<8x1xf32>
    %23 = tpu.reciprocal %22 {approx = true} : vector<8x1xf32> -> vector<8x1xf32>
    %24 = vector.broadcast %23 : vector<8x1xf32> to vector<8x32xf32>
    %25 = arith.mulf %14, %24 : vector<8x32xf32>
    %26 = vector.broadcast %2 : vector<1x32xf32> to vector<8x32xf32>
    %27 = arith.mulf %26, %25 : vector<8x32xf32>
    %28 = vector.broadcast %3 : vector<1x32xf32> to vector<8x32xf32>
    %29 = arith.addf %27, %28 : vector<8x32xf32>
    %30 = arith.truncf %29 : vector<8x32xf32> to vector<8x32xbf16>
    %c0_20 = arith.constant 0 : index
    %c0_21 = arith.constant 0 : index
    %31 = vector.load %arg2[%c0_20, %c0_21] : memref<32x96xbf16, #tpu.memory_space<vmem>>, vector<32x96xbf16>
    %cst_22 = arith.constant dense<0.000000e+00> : vector<8x96xf32>
    %32 = tpu.matmul %30, %31, %cst_22 {dimension_numbers = #tpu.dot_dimension_numbers<[1], [0], [0], [1], [0, 0, 1, 1], [], []>} : vector<8x32xbf16>, vector<32x96xbf16>, vector<8x96xf32> -> vector<8x96xf32>
    %33 = vector.broadcast %6 : vector<1x96xf32> to vector<8x96xf32>
    %34 = arith.addf %32, %33 : vector<8x96xf32>
    %35 = vector.extract_strided_slice %34 {offsets = [0, 0], sizes = [8, 8], strides = [1, 1]} : vector<8x96xf32> to vector<8x8xf32>
    %36 = vector.shape_cast %35 : vector<8x8xf32> to vector<1x8x8xf32>
    %37 = vector.extract_strided_slice %34 {offsets = [0, 8], sizes = [8, 8], strides = [1, 1]} : vector<8x96xf32> to vector<8x8xf32>
    %38 = vector.shape_cast %37 : vector<8x8xf32> to vector<1x8x8xf32>
    %39 = vector.extract_strided_slice %34 {offsets = [0, 16], sizes = [8, 8], strides = [1, 1]} : vector<8x96xf32> to vector<8x8xf32>
    %40 = vector.shape_cast %39 : vector<8x8xf32> to vector<1x8x8xf32>
    %41 = vector.extract_strided_slice %34 {offsets = [0, 24], sizes = [8, 8], strides = [1, 1]} : vector<8x96xf32> to vector<8x8xf32>
    %42 = vector.shape_cast %41 : vector<8x8xf32> to vector<1x8x8xf32>
    %43 = tpu.concatenate %36, %38, %40, %42 in 0 : vector<1x8x8xf32>, vector<1x8x8xf32>, vector<1x8x8xf32>, vector<1x8x8xf32> -> vector<4x8x8xf32>
    %44 = arith.truncf %43 : vector<4x8x8xf32> to vector<4x8x8xbf16>
    %45 = vector.extract_strided_slice %34 {offsets = [0, 32], sizes = [8, 8], strides = [1, 1]} : vector<8x96xf32> to vector<8x8xf32>
    %46 = vector.shape_cast %45 : vector<8x8xf32> to vector<1x8x8xf32>
    %47 = vector.extract_strided_slice %34 {offsets = [0, 40], sizes = [8, 8], strides = [1, 1]} : vector<8x96xf32> to vector<8x8xf32>
    %48 = vector.shape_cast %47 : vector<8x8xf32> to vector<1x8x8xf32>
    %49 = vector.extract_strided_slice %34 {offsets = [0, 48], sizes = [8, 8], strides = [1, 1]} : vector<8x96xf32> to vector<8x8xf32>
    %50 = vector.shape_cast %49 : vector<8x8xf32> to vector<1x8x8xf32>
    %51 = vector.extract_strided_slice %34 {offsets = [0, 56], sizes = [8, 8], strides = [1, 1]} : vector<8x96xf32> to vector<8x8xf32>
    %52 = vector.shape_cast %51 : vector<8x8xf32> to vector<1x8x8xf32>
    %53 = tpu.concatenate %46, %48, %50, %52 in 0 : vector<1x8x8xf32>, vector<1x8x8xf32>, vector<1x8x8xf32>, vector<1x8x8xf32> -> vector<4x8x8xf32>
    %54 = arith.truncf %53 : vector<4x8x8xf32> to vector<4x8x8xbf16>
    %55 = vector.extract_strided_slice %34 {offsets = [0, 64], sizes = [8, 8], strides = [1, 1]} : vector<8x96xf32> to vector<8x8xf32>
    %56 = vector.shape_cast %55 : vector<8x8xf32> to vector<1x8x8xf32>
    %57 = vector.extract_strided_slice %34 {offsets = [0, 72], sizes = [8, 8], strides = [1, 1]} : vector<8x96xf32> to vector<8x8xf32>
    %58 = vector.shape_cast %57 : vector<8x8xf32> to vector<1x8x8xf32>
    %59 = vector.extract_strided_slice %34 {offsets = [0, 80], sizes = [8, 8], strides = [1, 1]} : vector<8x96xf32> to vector<8x8xf32>
    %60 = vector.shape_cast %59 : vector<8x8xf32> to vector<1x8x8xf32>
    %61 = vector.extract_strided_slice %34 {offsets = [0, 88], sizes = [8, 8], strides = [1, 1]} : vector<8x96xf32> to vector<8x8xf32>
    %62 = vector.shape_cast %61 : vector<8x8xf32> to vector<1x8x8xf32>
    %63 = tpu.concatenate %56, %58, %60, %62 in 0 : vector<1x8x8xf32>, vector<1x8x8xf32>, vector<1x8x8xf32>, vector<1x8x8xf32> -> vector<4x8x8xf32>
    %64 = arith.truncf %63 : vector<4x8x8xf32> to vector<4x8x8xbf16>
    "tpu.trace_start"() <{level = 10 : i32, message = "bqd,bkd->bqk"}> : () -> ()
    %cst_23 = arith.constant dense<0.000000e+00> : vector<4x8x8xf32>
    %65 = tpu.matmul %44, %54, %cst_23 {dimension_numbers = #tpu.dot_dimension_numbers<[2], [2], [1], [1], [0, 0, 0, 1, 1, 1], [0], [0]>} : vector<4x8x8xbf16>, vector<4x8x8xbf16>, vector<4x8x8xf32> -> vector<4x8x8xf32>
    "tpu.trace_stop"() : () -> ()
    %cst_24 = arith.constant dense<0xFF800000> : vector<4x8xf32>
    %66 = vector.multi_reduction <maximumf>, %65, %cst_24 [2] : vector<4x8x8xf32> to vector<4x8xf32>
    %67 = vector.shape_cast %66 : vector<4x8xf32> to vector<4x8x1xf32>
    %68 = vector.broadcast %67 : vector<4x8x1xf32> to vector<4x8x8xf32>
    %69 = arith.subf %65, %68 : vector<4x8x8xf32>
    %70 = math.exp %69 : vector<4x8x8xf32>
    %cst_25 = arith.constant dense<0.000000e+00> : vector<4x8xf32>
    %71 = vector.multi_reduction <add>, %70, %cst_25 [2] : vector<4x8x8xf32> to vector<4x8xf32>
    %72 = vector.shape_cast %71 : vector<4x8xf32> to vector<4x8x1xf32>
    %73 = tpu.reciprocal %72 {approx = true} : vector<4x8x1xf32> -> vector<4x8x1xf32>
    %74 = vector.broadcast %73 : vector<4x8x1xf32> to vector<4x8x8xf32>
    %75 = arith.mulf %70, %74 : vector<4x8x8xf32>
    %76 = arith.truncf %75 : vector<4x8x8xf32> to vector<4x8x8xbf16>
    "tpu.trace_start"() <{level = 10 : i32, message = "bqk,bkd->bqd"}> : () -> ()
    %cst_26 = arith.constant dense<0.000000e+00> : vector<4x8x8xf32>
    %77 = tpu.matmul %76, %64, %cst_26 {dimension_numbers = #tpu.dot_dimension_numbers<[2], [1], [1], [2], [0, 0, 0, 1, 1, 2], [0], [0]>} : vector<4x8x8xbf16>, vector<4x8x8xbf16>, vector<4x8x8xf32> -> vector<4x8x8xf32>
    "tpu.trace_stop"() : () -> ()
    %78 = vector.extract_strided_slice %77 {offsets = [0, 0, 0], sizes = [1, 8, 8], strides = [1, 1, 1]} : vector<4x8x8xf32> to vector<1x8x8xf32>
    %79 = vector.shape_cast %78 : vector<1x8x8xf32> to vector<8x8xf32>
    %80 = vector.extract_strided_slice %77 {offsets = [1, 0, 0], sizes = [1, 8, 8], strides = [1, 1, 1]} : vector<4x8x8xf32> to vector<1x8x8xf32>
    %81 = vector.shape_cast %80 : vector<1x8x8xf32> to vector<8x8xf32>
    %82 = vector.extract_strided_slice %77 {offsets = [2, 0, 0], sizes = [1, 8, 8], strides = [1, 1, 1]} : vector<4x8x8xf32> to vector<1x8x8xf32>
    %83 = vector.shape_cast %82 : vector<1x8x8xf32> to vector<8x8xf32>
    %84 = vector.extract_strided_slice %77 {offsets = [3, 0, 0], sizes = [1, 8, 8], strides = [1, 1, 1]} : vector<4x8x8xf32> to vector<1x8x8xf32>
    %85 = vector.shape_cast %84 : vector<1x8x8xf32> to vector<8x8xf32>
    %86 = tpu.concatenate %79, %81, %83, %85 in 1 : vector<8x8xf32>, vector<8x8xf32>, vector<8x8xf32>, vector<8x8xf32> -> vector<8x32xf32>
    %87 = arith.truncf %86 : vector<8x32xf32> to vector<8x32xbf16>
    %c0_27 = arith.constant 0 : index
    %c0_28 = arith.constant 0 : index
    %88 = vector.load %arg4[%c0_27, %c0_28] : memref<32x32xbf16, #tpu.memory_space<vmem>>, vector<32x32xbf16>
    %cst_29 = arith.constant dense<0.000000e+00> : vector<8x32xf32>
    %89 = tpu.matmul %87, %88, %cst_29 {dimension_numbers = #tpu.dot_dimension_numbers<[1], [0], [0], [1], [0, 0, 1, 1], [], []>} : vector<8x32xbf16>, vector<32x32xbf16>, vector<8x32xf32> -> vector<8x32xf32>
    %90 = arith.addf %1, %89 : vector<8x32xf32>
    %91 = vector.broadcast %7 : vector<1x32xf32> to vector<8x32xf32>
    %92 = arith.addf %90, %91 : vector<8x32xf32>
    %cst_30 = arith.constant dense<0.000000e+00> : vector<8xf32>
    %93 = vector.multi_reduction <add>, %92, %cst_30 [1] : vector<8x32xf32> to vector<8xf32>
    %94 = vector.shape_cast %93 : vector<8xf32> to vector<8x1xf32>
    %cst_31 = arith.constant 3.200000e+01 : f32
    %95 = vector.broadcast %cst_31 : f32 to vector<8x1xf32>
    %96 = arith.divf %94, %95 : vector<8x1xf32>
    %97 = vector.broadcast %96 : vector<8x1xf32> to vector<8x32xf32>
    %98 = arith.subf %92, %97 : vector<8x32xf32>
    %99 = arith.mulf %98, %98 : vector<8x32xf32>
    %cst_32 = arith.constant dense<0.000000e+00> : vector<8xf32>
    %100 = vector.multi_reduction <add>, %99, %cst_32 [1] : vector<8x32xf32> to vector<8xf32>
    %101 = vector.shape_cast %100 : vector<8xf32> to vector<8x1xf32>
    %cst_33 = arith.constant 0.0322580636 : f32
    %102 = vector.broadcast %cst_33 : f32 to vector<8x1xf32>
    %103 = arith.mulf %101, %102 : vector<8x1xf32>
    %104 = math.sqrt %103 : vector<8x1xf32>
    %cst_34 = arith.constant 9.99999997E-7 : f32
    %105 = vector.broadcast %cst_34 : f32 to vector<8x1xf32>
    %106 = arith.addf %104, %105 : vector<8x1xf32>
    %107 = tpu.reciprocal %106 {approx = true} : vector<8x1xf32> -> vector<8x1xf32>
    %108 = vector.broadcast %107 : vector<8x1xf32> to vector<8x32xf32>
    %109 = arith.mulf %98, %108 : vector<8x32xf32>
    %110 = vector.broadcast %4 : vector<1x32xf32> to vector<8x32xf32>
    %111 = arith.mulf %110, %109 : vector<8x32xf32>
    %112 = vector.broadcast %5 : vector<1x32xf32> to vector<8x32xf32>
    %113 = arith.addf %111, %112 : vector<8x32xf32>
    %114 = arith.truncf %113 : vector<8x32xf32> to vector<8x32xbf16>
    %cst_35 = arith.constant 0.000000e+00 : f32
    %115 = vector.broadcast %cst_35 : f32 to vector<8x32xf32>
    %c0_i32 = arith.constant 0 : i32
    %116 = arith.index_cast %c0_i32 : i32 to index
    %c0_36 = arith.constant 0 : index
    %c0_37 = arith.constant 0 : index
    %117 = vector.load %arg6[%116, %c0_36, %c0_37] : memref<1x32x128xbf16, #tpu.memory_space<vmem>>, vector<1x32x128xbf16>
    %118 = vector.shape_cast %117 : vector<1x32x128xbf16> to vector<32x128xbf16>
    %cst_38 = arith.constant dense<0.000000e+00> : vector<8x128xf32>
    %119 = tpu.matmul %114, %118, %cst_38 {dimension_numbers = #tpu.dot_dimension_numbers<[1], [0], [0], [1], [0, 0, 1, 1], [], []>} : vector<8x32xbf16>, vector<32x128xbf16>, vector<8x128xf32> -> vector<8x128xf32>
    %120 = arith.index_cast %c0_i32 : i32 to index
    %c0_39 = arith.constant 0 : index
    %c0_40 = arith.constant 0 : index
    %121 = vector.load %arg7[%120, %c0_39, %c0_40] : memref<1x1x128xf32, #tpu.memory_space<vmem>>, vector<1x1x128xf32>
    %122 = vector.shape_cast %121 : vector<1x1x128xf32> to vector<1x128xf32>
    %123 = vector.broadcast %122 : vector<1x128xf32> to vector<8x128xf32>
    %124 = arith.addf %119, %123 : vector<8x128xf32>
    %cst_41 = arith.constant 0.000000e+00 : f32
    %125 = vector.broadcast %cst_41 : f32 to vector<8x128xf32>
    %126 = arith.maximumf %124, %125 : vector<8x128xf32>
    %127 = arith.truncf %126 : vector<8x128xf32> to vector<8x128xbf16>
    %128 = arith.index_cast %c0_i32 : i32 to index
    %c0_42 = arith.constant 0 : index
    %c0_43 = arith.constant 0 : index
    %129 = vector.load %arg8[%128, %c0_42, %c0_43] : memref<1x128x32xbf16, #tpu.memory_space<vmem>>, vector<1x128x32xbf16>
    %130 = vector.shape_cast %129 : vector<1x128x32xbf16> to vector<128x32xbf16>
    %cst_44 = arith.constant dense<0.000000e+00> : vector<8x32xf32>
    %131 = tpu.matmul %127, %130, %cst_44 {dimension_numbers = #tpu.dot_dimension_numbers<[1], [0], [0], [1], [0, 0, 1, 1], [], []>} : vector<8x128xbf16>, vector<128x32xbf16>, vector<8x32xf32> -> vector<8x32xf32>
    %132 = arith.addf %115, %131 : vector<8x32xf32>
    %c1_i32 = arith.constant 1 : i32
    %133 = arith.addf %92, %132 : vector<8x32xf32>
    %134 = vector.broadcast %8 : vector<1x32xf32> to vector<8x32xf32>
    %135 = arith.addf %133, %134 : vector<8x32xf32>
    %136 = vector.extract_strided_slice %135 {offsets = [0, 0], sizes = [1, 32], strides = [1, 1]} : vector<8x32xf32> to vector<1x32xf32>
    %c0_45 = arith.constant 0 : index
    %c0_46 = arith.constant 0 : index
    %c0_47 = arith.constant 0 : index
    %137 = vector.load %arg14[%c0_45, %c0_46, %c0_47] : memref<1x1x256xf32, #tpu.memory_space<vmem>>, vector<1x1x32xf32>
    %138 = vector.shape_cast %137 : vector<1x1x32xf32> to vector<1x32xf32>
    %139 = vector.shape_cast %136 : vector<1x32xf32> to vector<1x1x32xf32>
    tpu.vector_store %arg14[%c0_45, %c0_46, %c0_47], %139 {strides = array<i32>} : memref<1x1x256xf32, #tpu.memory_space<vmem>>, vector<1x1x32xf32>,
    %140 = vector.extract_strided_slice %135 {offsets = [1, 0], sizes = [1, 32], strides = [1, 1]} : vector<8x32xf32> to vector<1x32xf32>
    %c0_48 = arith.constant 0 : index
    %c0_49 = arith.constant 0 : index
    %c32 = arith.constant 32 : index
    %141 = vector.load %arg14[%c0_48, %c0_49, %c32] : memref<1x1x256xf32, #tpu.memory_space<vmem>>, vector<1x1x32xf32>
    %142 = vector.shape_cast %141 : vector<1x1x32xf32> to vector<1x32xf32>
    %143 = vector.shape_cast %140 : vector<1x32xf32> to vector<1x1x32xf32>
    tpu.vector_store %arg14[%c0_48, %c0_49, %c32], %143 {strides = array<i32>} : memref<1x1x256xf32, #tpu.memory_space<vmem>>, vector<1x1x32xf32>,
    %144 = vector.extract_strided_slice %135 {offsets = [2, 0], sizes = [1, 32], strides = [1, 1]} : vector<8x32xf32> to vector<1x32xf32>
    %c0_50 = arith.constant 0 : index
    %c0_51 = arith.constant 0 : index
    %c64 = arith.constant 64 : index
    %145 = vector.load %arg14[%c0_50, %c0_51, %c64] : memref<1x1x256xf32, #tpu.memory_space<vmem>>, vector<1x1x32xf32>
    %146 = vector.shape_cast %145 : vector<1x1x32xf32> to vector<1x32xf32>
    %147 = vector.shape_cast %144 : vector<1x32xf32> to vector<1x1x32xf32>
    tpu.vector_store %arg14[%c0_50, %c0_51, %c64], %147 {strides = array<i32>} : memref<1x1x256xf32, #tpu.memory_space<vmem>>, vector<1x1x32xf32>,
    %148 = vector.extract_strided_slice %135 {offsets = [3, 0], sizes = [1, 32], strides = [1, 1]} : vector<8x32xf32> to vector<1x32xf32>
    %c0_52 = arith.constant 0 : index
    %c0_53 = arith.constant 0 : index
    %c96 = arith.constant 96 : index
    %149 = vector.load %arg14[%c0_52, %c0_53, %c96] : memref<1x1x256xf32, #tpu.memory_space<vmem>>, vector<1x1x32xf32>
    %150 = vector.shape_cast %149 : vector<1x1x32xf32> to vector<1x32xf32>
    %151 = vector.shape_cast %148 : vector<1x32xf32> to vector<1x1x32xf32>
    tpu.vector_store %arg14[%c0_52, %c0_53, %c96], %151 {strides = array<i32>} : memref<1x1x256xf32, #tpu.memory_space<vmem>>, vector<1x1x32xf32>,
    %152 = vector.extract_strided_slice %135 {offsets = [4, 0], sizes = [1, 32], strides = [1, 1]} : vector<8x32xf32> to vector<1x32xf32>
    %c0_54 = arith.constant 0 : index
    %c0_55 = arith.constant 0 : index
    %c128 = arith.constant 128 : index
    %153 = vector.load %arg14[%c0_54, %c0_55, %c128] : memref<1x1x256xf32, #tpu.memory_space<vmem>>, vector<1x1x32xf32>
    %154 = vector.shape_cast %153 : vector<1x1x32xf32> to vector<1x32xf32>
    %155 = vector.shape_cast %152 : vector<1x32xf32> to vector<1x1x32xf32>
    tpu.vector_store %arg14[%c0_54, %c0_55, %c128], %155 {strides = array<i32>} : memref<1x1x256xf32, #tpu.memory_space<vmem>>, vector<1x1x32xf32>,
    %156 = vector.extract_strided_slice %135 {offsets = [5, 0], sizes = [1, 32], strides = [1, 1]} : vector<8x32xf32> to vector<1x32xf32>
    %c0_56 = arith.constant 0 : index
    %c0_57 = arith.constant 0 : index
    %c160 = arith.constant 160 : index
    %157 = vector.load %arg14[%c0_56, %c0_57, %c160] : memref<1x1x256xf32, #tpu.memory_space<vmem>>, vector<1x1x32xf32>
    %158 = vector.shape_cast %157 : vector<1x1x32xf32> to vector<1x32xf32>
    %159 = vector.shape_cast %156 : vector<1x32xf32> to vector<1x1x32xf32>
    tpu.vector_store %arg14[%c0_56, %c0_57, %c160], %159 {strides = array<i32>} : memref<1x1x256xf32, #tpu.memory_space<vmem>>, vector<1x1x32xf32>,
    %160 = vector.extract_strided_slice %135 {offsets = [6, 0], sizes = [1, 32], strides = [1, 1]} : vector<8x32xf32> to vector<1x32xf32>
    %c0_58 = arith.constant 0 : index
    %c0_59 = arith.constant 0 : index
    %c192 = arith.constant 192 : index
    %161 = vector.load %arg14[%c0_58, %c0_59, %c192] : memref<1x1x256xf32, #tpu.memory_space<vmem>>, vector<1x1x32xf32>
    %162 = vector.shape_cast %161 : vector<1x1x32xf32> to vector<1x32xf32>
    %163 = vector.shape_cast %160 : vector<1x32xf32> to vector<1x1x32xf32>
    tpu.vector_store %arg14[%c0_58, %c0_59, %c192], %163 {strides = array<i32>} : memref<1x1x256xf32, #tpu.memory_space<vmem>>, vector<1x1x32xf32>,
    %164 = vector.extract_strided_slice %135 {offsets = [7, 0], sizes = [1, 32], strides = [1, 1]} : vector<8x32xf32> to vector<1x32xf32>
    %c0_60 = arith.constant 0 : index
    %c0_61 = arith.constant 0 : index
    %c224 = arith.constant 224 : index
    %165 = vector.load %arg14[%c0_60, %c0_61, %c224] : memref<1x1x256xf32, #tpu.memory_space<vmem>>, vector<1x1x32xf32>
    %166 = vector.shape_cast %165 : vector<1x1x32xf32> to vector<1x32xf32>
    %167 = vector.shape_cast %164 : vector<1x32xf32> to vector<1x1x32xf32>
    tpu.vector_store %arg14[%c0_60, %c0_61, %c224], %167 {strides = array<i32>} : memref<1x1x256xf32, #tpu.memory_space<vmem>>, vector<1x1x32xf32>,
    return
  }
  func.func @transform_0(%arg0: i32) -> (i32, i32, i32) {
    %c0_i32 = arith.constant 0 : i32
    %c0_i32_0 = arith.constant 0 : i32
    %c0_i32_1 = arith.constant 0 : i32
    return %arg0, %c0_i32, %c0_i32_0 : i32, i32, i32
  }
  func.func @transform_1(%arg0: i32) -> (i32, i32) {
    %c0_i32 = arith.constant 0 : i32
    %c0_i32_0 = arith.constant 0 : i32
    %c0_i32_1 = arith.constant 0 : i32
    return %c0_i32, %c0_i32_0 : i32, i32
  }
  func.func @transform_2(%arg0: i32) -> (i32, i32) {
    %c0_i32 = arith.constant 0 : i32
    %c0_i32_0 = arith.constant 0 : i32
    %c0_i32_1 = arith.constant 0 : i32
    return %c0_i32, %c0_i32_0 : i32, i32
  }
  func.func @transform_3(%arg0: i32) -> (i32, i32) {
    %c0_i32 = arith.constant 0 : i32
    %c0_i32_0 = arith.constant 0 : i32
    %c0_i32_1 = arith.constant 0 : i32
    return %c0_i32, %c0_i32_0 : i32, i32
  }
  func.func @transform_4(%arg0: i32) -> (i32, i32) {
    %c0_i32 = arith.constant 0 : i32
    %c0_i32_0 = arith.constant 0 : i32
    %c0_i32_1 = arith.constant 0 : i32
    return %c0_i32, %c0_i32_0 : i32, i32
  }
  func.func @transform_5(%arg0: i32) -> (i32, i32, i32) {
    %c0_i32 = arith.constant 0 : i32
    %c0_i32_0 = arith.constant 0 : i32
    %c0_i32_1 = arith.constant 0 : i32
    %c0_i32_2 = arith.constant 0 : i32
    return %c0_i32, %c0_i32_0, %c0_i32_1 : i32, i32, i32
  }
  func.func @transform_6(%arg0: i32) -> (i32, i32, i32) {
    %c0_i32 = arith.constant 0 : i32
    %c0_i32_0 = arith.constant 0 : i32
    %c0_i32_1 = arith.constant 0 : i32
    %c0_i32_2 = arith.constant 0 : i32
    return %c0_i32, %c0_i32_0, %c0_i32_1 : i32, i32, i32
  }
  func.func @transform_7(%arg0: i32) -> (i32, i32, i32) {
    %c0_i32 = arith.constant 0 : i32
    %c0_i32_0 = arith.constant 0 : i32
    %c0_i32_1 = arith.constant 0 : i32
    %c0_i32_2 = arith.constant 0 : i32
    return %c0_i32, %c0_i32_0, %c0_i32_1 : i32, i32, i32
  }
  func.func @transform_8(%arg0: i32) -> (i32, i32) {
    %c0_i32 = arith.constant 0 : i32
    %c0_i32_0 = arith.constant 0 : i32
    %c0_i32_1 = arith.constant 0 : i32
    return %c0_i32, %c0_i32_0 : i32, i32
  }
  func.func @transform_9(%arg0: i32) -> (i32, i32) {
    %c0_i32 = arith.constant 0 : i32
    %c0_i32_0 = arith.constant 0 : i32
    %c0_i32_1 = arith.constant 0 : i32
    return %c0_i32, %c0_i32_0 : i32, i32
  }
  func.func @transform_10(%arg0: i32) -> (i32, i32) {
    %c0_i32 = arith.constant 0 : i32
    %c0_i32_0 = arith.constant 0 : i32
    %c0_i32_1 = arith.constant 0 : i32
    return %c0_i32, %c0_i32_0 : i32, i32
  }
  func.func @transform_11(%arg0: i32) -> (i32, i32) {
    %c0_i32 = arith.constant 0 : i32
    %c0_i32_0 = arith.constant 0 : i32
    %c0_i32_1 = arith.constant 0 : i32
    return %c0_i32, %c0_i32_0 : i32, i32
  }
  func.func @transform_12(%arg0: i32) -> (i32, i32) {
    %c0_i32 = arith.constant 0 : i32
    %c0_i32_0 = arith.constant 0 : i32
    %c0_i32_1 = arith.constant 0 : i32
    return %c0_i32, %c0_i32_0 : i32, i32
  }
  func.func @transform_13(%arg0: i32) -> (i32, i32, i32) {
    %c0_i32 = arith.constant 0 : i32
    %c0_i32_0 = arith.constant 0 : i32
    %c0_i32_1 = arith.constant 0 : i32
    return %arg0, %c0_i32, %c0_i32_0 : i32, i32, i32
  }
}

</mosaic_0001>

<llo_original>
// kernel: tpu_custom_call.1
$region0: #{tpu_custom_call.1}
  #allocation0 [shape = 'u32[]', space=smem, size = 0x4, offset = 0x4, fixed_abs, tag = 'smem constant byte address 0x4 - core index']
  #allocation1 [shape = 'u32[144,128]{1,0:T(1,128)}', space=vmem, size = 0x12000, scoped, tag = 'internal scratch']
  %s0 = inlined_call_operand.vmem [shape: f32[2,8,32], index: 0, kind: input, shape index: {}]
  %s1 = inlined_call_operand.vmem [shape: bf16[32,96], index: 1, kind: input, shape index: {}]
  %s2 = inlined_call_operand.vmem [shape: f32[1,96], index: 2, kind: input, shape index: {}]
  %s3 = inlined_call_operand.vmem [shape: bf16[32,32], index: 3, kind: input, shape index: {}]
  %s4 = inlined_call_operand.vmem [shape: f32[1,32], index: 4, kind: input, shape index: {}]
  %s5 = inlined_call_operand.vmem [shape: bf16[1,32,128], index: 5, kind: input, shape index: {}]
  %s6 = inlined_call_operand.vmem [shape: f32[1,1,128], index: 6, kind: input, shape index: {}]
  %s7 = inlined_call_operand.vmem [shape: bf16[1,128,32], index: 7, kind: input, shape index: {}]
  %s8 = inlined_call_operand.vmem [shape: f32[1,32], index: 8, kind: input, shape index: {}]
  %s9 = inlined_call_operand.vmem [shape: f32[1,32], index: 9, kind: input, shape index: {}]
  %s10 = inlined_call_operand.vmem [shape: f32[1,32], index: 10, kind: input, shape index: {}]
  %s11 = inlined_call_operand.vmem [shape: f32[1,32], index: 11, kind: input, shape index: {}]
  %s12 = inlined_call_operand.vmem [shape: f32[1,32], index: 12, kind: input, shape index: {}]
  %s13 = inlined_call_operand.hbm [shape: f32[2,1,256], index: 13, kind: output, shape index: {}]
  %s14 = sld [smem:[#allocation0]]
  $region85: #{tpu_custom_call.1} parent=0
    _
  %s16 = ssub.s32 1, %s14
  %s17 = scalar_select 0, %s16, %s14
  $region1: #{tpu_custom_call.1} parent=0
    #allocation2 [shape = 'u8[2048]{0}', space=vmem, size = 0x800, scoped, tag = 'output window, operand 0']
    #allocation3 [shape = 's32[2]{0}', space=sflag, size = 0x8, scoped, tag = 'scoped memory for tpu_custom_call.1']
    %18 = vsyncpa [#allocation3], 0
    %s19 = scalar_lea.sflag [#allocation3], 1
    %20 = vsyncpa %s19, 0
    loop: start=0, step=1, limit=4
    $region2: #{tpu_custom_call.1} parent=1 // loop_pre_header
      _
    $region3: #{tpu_custom_call.1} parent=1 // loop_header
      %s22 = sphi 0, %s26
      %p23 = scmp.ge.s32.totalorder %s22, 4
      %s32 = sphi 0, %s34
      %s35 = sphi 0, %s32
      %s36 = sphi 0, %s35
      %s52 = sphi 0, %s36
      %s56 = sphi 0, %s56
      %s58 = sphi 0, %s56
      %s59 = sphi 0, %s58
      %s73 = sphi 0, %s59
      %s77 = sphi 0, %s77
      %s79 = sphi 0, %s77
      %s80 = sphi 0, %s79
      %s94 = sphi 0, %s80
      %s98 = sphi 0, %s98
      %s100 = sphi 0, %s98
      %s101 = sphi 0, %s100
      %s115 = sphi 0, %s101
      %s119 = sphi 0, %s119
      %s121 = sphi 0, %s119
      %s122 = sphi 0, %s121
      %s136 = sphi 0, %s122
      %s140 = sphi 0, %s140
      %s142 = sphi 0, %s140
      %s143 = sphi 0, %s142
      %s157 = sphi 0, %s143
      %s161 = sphi 0, %s161
      %s163 = sphi 0, %s161
      %s164 = sphi 0, %s163
      %s178 = sphi 0, %s164
      %s182 = sphi 0, %s182
      %s184 = sphi 0, %s182
      %s185 = sphi 0, %s184
      %s199 = sphi 0, %s185
      %s203 = sphi 0, %s203
      %s205 = sphi 0, %s203
      %s206 = sphi 0, %s205
      %s220 = sphi 0, %s206
      %s224 = sphi 0, %s224
      %s226 = sphi 0, %s224
      %s227 = sphi 0, %s226
      %s241 = sphi 0, %s227
      %s245 = sphi 0, %s245
      %s247 = sphi 0, %s245
      %s248 = sphi 0, %s247
      %s262 = sphi 0, %s248
      %s266 = sphi 0, %s266
      %s268 = sphi 0, %s266
      %s269 = sphi 0, %s268
      %s283 = sphi 0, %s269
      %s287 = sphi 0, %s287
      %s289 = sphi 0, %s287
      %s290 = sphi 0, %s289
      %s304 = sphi 0, %s290
      %s310 = sphi 0, %s312
      %s313 = sphi 0, %s310
      %s314 = sphi 0, %s313
      %s330 = sphi 0, %s314
    $region4: #{tpu_custom_call.1} parent=1 // loop_header_branch
      %25 = sbr.rel (%p23) target = $region8
    $region5: #{tpu_custom_call.1} parent=1 // loop_body
      %s27 = ssub.s32 %s22, 1
      %s28 = ssub.s32 %s22, 2
      %s29 = sadd.s32 %s22, 1
      %s30 = ssub.s32 %s22, %s29
      %p31 = scmp.eq.s32.totalorder %s30, 0
      %s33 = sadd.s32 %s32, 1
      %s34 = scalar_select %p31, %s32, %s33
      %p37 = pneg %p31
      %p38 = scmp.eq.s32.totalorder %s22, 1
      %p39 = por %p37, %p38
      %p40 = scmp.ne.s32.totalorder %s32, %s35
      %p41 = scmp.eq.s32.totalorder %s22, 0
      %p42 = por %p40, %p41
      %p43 = scmp.ne.s32.totalorder %s32, %s35
      %p44 = scmp.eq.s32.totalorder %s27, 1
      %p45 = por %p43, %p44
      %p46 = scmp.ne.s32.totalorder %s35, %s36
      %p47 = scmp.eq.s32.totalorder %s27, 0
      %p48 = por %p46, %p47
      %p49 = scmp.ne.s32.totalorder %s35, %s36
      %p50 = scmp.eq.s32.totalorder %s28, 1
      %p51 = por %p49, %p50
      %p53 = scmp.ne.s32.totalorder %s36, %s52
      %p54 = scmp.eq.s32.totalorder %s28, 0
      %p55 = por %p53, %p54
      %s57 = sadd.s32 %s56, 1
      %p60 = scmp.eq.s32.totalorder %s22, 1
      %p61 = scmp.ne.s32.totalorder %s56, %s58
      %p62 = scmp.eq.s32.totalorder %s22, 0
      %p63 = por %p61, %p62
      %p64 = scmp.ne.s32.totalorder %s56, %s58
      %p65 = scmp.eq.s32.totalorder %s27, 1
      %p66 = por %p64, %p65
      %p67 = scmp.ne.s32.totalorder %s58, %s59
      %p68 = scmp.eq.s32.totalorder %s27, 0
      %p69 = por %p67, %p68
      %p70 = scmp.ne.s32.totalorder %s58, %s59
      %p71 = scmp.eq.s32.totalorder %s28, 1
      %p72 = por %p70, %p71
      %p74 = scmp.ne.s32.totalorder %s59, %s73
      %p75 = scmp.eq.s32.totalorder %s28, 0
      %p76 = por %p74, %p75
      %s78 = sadd.s32 %s77, 1
      %p81 = scmp.eq.s32.totalorder %s22, 1
      %p82 = scmp.ne.s32.totalorder %s77, %s79
      %p83 = scmp.eq.s32.totalorder %s22, 0
      %p84 = por %p82, %p83
      %p85 = scmp.ne.s32.totalorder %s77, %s79
      %p86 = scmp.eq.s32.totalorder %s27, 1
      %p87 = por %p85, %p86
      %p88 = scmp.ne.s32.totalorder %s79, %s80
      %p89 = scmp.eq.s32.totalorder %s27, 0
      %p90 = por %p88, %p89
      %p91 = scmp.ne.s32.totalorder %s79, %s80
      %p92 = scmp.eq.s32.totalorder %s28, 1
      %p93 = por %p91, %p92
      %p95 = scmp.ne.s32.totalorder %s80, %s94
      %p96 = scmp.eq.s32.totalorder %s28, 0
      %p97 = por %p95, %p96
      %s99 = sadd.s32 %s98, 1
      %p102 = scmp.eq.s32.totalorder %s22, 1
      %p103 = scmp.ne.s32.totalorder %s98, %s100
      %p104 = scmp.eq.s32.totalorder %s22, 0
      %p105 = por %p103, %p104
      %p106 = scmp.ne.s32.totalorder %s98, %s100
      %p107 = scmp.eq.s32.totalorder %s27, 1
      %p108 = por %p106, %p107
      %p109 = scmp.ne.s32.totalorder %s100, %s101
      %p110 = scmp.eq.s32.totalorder %s27, 0
      %p111 = por %p109, %p110
      %p112 = scmp.ne.s32.totalorder %s100, %s101
      %p113 = scmp.eq.s32.totalorder %s28, 1
      %p114 = por %p112, %p113
      %p116 = scmp.ne.s32.totalorder %s101, %s115
      %p117 = scmp.eq.s32.totalorder %s28, 0
      %p118 = por %p116, %p117
      %s120 = sadd.s32 %s119, 1
      %p123 = scmp.eq.s32.totalorder %s22, 1
      %p124 = scmp.ne.s32.totalorder %s119, %s121
      %p125 = scmp.eq.s32.totalorder %s22, 0
      %p126 = por %p124, %p125
      %p127 = scmp.ne.s32.totalorder %s119, %s121
      %p128 = scmp.eq.s32.totalorder %s27, 1
      %p129 = por %p127, %p128
      %p130 = scmp.ne.s32.totalorder %s121, %s122
      %p131 = scmp.eq.s32.totalorder %s27, 0
      %p132 = por %p130, %p131
      %p133 = scmp.ne.s32.totalorder %s121, %s122
      %p134 = scmp.eq.s32.totalorder %s28, 1
      %p135 = por %p133, %p134
      %p137 = scmp.ne.s32.totalorder %s122, %s136
      %p138 = scmp.eq.s32.totalorder %s28, 0
      %p139 = por %p137, %p138
      %s141 = sadd.s32 %s140, 1
      %p144 = scmp.eq.s32.totalorder %s22, 1
      %p145 = scmp.ne.s32.totalorder %s140, %s142
      %p146 = scmp.eq.s32.totalorder %s22, 0
      %p147 = por %p145, %p146
      %p148 = scmp.ne.s32.totalorder %s140, %s142
      %p149 = scmp.eq.s32.totalorder %s27, 1
      %p150 = por %p148, %p149
      %p151 = scmp.ne.s32.totalorder %s142, %s143
      %p152 = scmp.eq.s32.totalorder %s27, 0
      %p153 = por %p151, %p152
      %p154 = scmp.ne.s32.totalorder %s142, %s143
      %p155 = scmp.eq.s32.totalorder %s28, 1
      %p156 = por %p154, %p155
      %p158 = scmp.ne.s32.totalorder %s143, %s157
      %p159 = scmp.eq.s32.totalorder %s28, 0
      %p160 = por %p158, %p159
      %s162 = sadd.s32 %s161, 1
      %p165 = scmp.eq.s32.totalorder %s22, 1
      %p166 = scmp.ne.s32.totalorder %s161, %s163
      %p167 = scmp.eq.s32.totalorder %s22, 0
      %p168 = por %p166, %p167
      %p169 = scmp.ne.s32.totalorder %s161, %s163
      %p170 = scmp.eq.s32.totalorder %s27, 1
      %p171 = por %p169, %p170
      %p172 = scmp.ne.s32.totalorder %s163, %s164
      %p173 = scmp.eq.s32.totalorder %s27, 0
      %p174 = por %p172, %p173
      %p175 = scmp.ne.s32.totalorder %s163, %s164
      %p176 = scmp.eq.s32.totalorder %s28, 1
      %p177 = por %p175, %p176
      %p179 = scmp.ne.s32.totalorder %s164, %s178
      %p180 = scmp.eq.s32.totalorder %s28, 0
      %p181 = por %p179, %p180
      %s183 = sadd.s32 %s182, 1
      %p186 = scmp.eq.s32.totalorder %s22, 1
      %p187 = scmp.ne.s32.totalorder %s182, %s184
      %p188 = scmp.eq.s32.totalorder %s22, 0
      %p189 = por %p187, %p188
      %p190 = scmp.ne.s32.totalorder %s182, %s184
      %p191 = scmp.eq.s32.totalorder %s27, 1
      %p192 = por %p190, %p191
      %p193 = scmp.ne.s32.totalorder %s184, %s185
      %p194 = scmp.eq.s32.totalorder %s27, 0
      %p195 = por %p193, %p194
      %p196 = scmp.ne.s32.totalorder %s184, %s185
      %p197 = scmp.eq.s32.totalorder %s28, 1
      %p198 = por %p196, %p197
      %p200 = scmp.ne.s32.totalorder %s185, %s199
      %p201 = scmp.eq.s32.totalorder %s28, 0
      %p202 = por %p200, %p201
      %s204 = sadd.s32 %s203, 1
      %p207 = scmp.eq.s32.totalorder %s22, 1
      %p208 = scmp.ne.s32.totalorder %s203, %s205
      %p209 = scmp.eq.s32.totalorder %s22, 0
      %p210 = por %p208, %p209
      %p211 = scmp.ne.s32.totalorder %s203, %s205
      %p212 = scmp.eq.s32.totalorder %s27, 1
      %p213 = por %p211, %p212
      %p214 = scmp.ne.s32.totalorder %s205, %s206
      %p215 = scmp.eq.s32.totalorder %s27, 0
      %p216 = por %p214, %p215
      %p217 = scmp.ne.s32.totalorder %s205, %s206
      %p218 = scmp.eq.s32.totalorder %s28, 1
      %p219 = por %p217, %p218
      %p221 = scmp.ne.s32.totalorder %s206, %s220
      %p222 = scmp.eq.s32.totalorder %s28, 0
      %p223 = por %p221, %p222
      %s225 = sadd.s32 %s224, 1
      %p228 = scmp.eq.s32.totalorder %s22, 1
      %p229 = scmp.ne.s32.totalorder %s224, %s226
      %p230 = scmp.eq.s32.totalorder %s22, 0
      %p231 = por %p229, %p230
      %p232 = scmp.ne.s32.totalorder %s224, %s226
      %p233 = scmp.eq.s32.totalorder %s27, 1
      %p234 = por %p232, %p233
      %p235 = scmp.ne.s32.totalorder %s226, %s227
      %p236 = scmp.eq.s32.totalorder %s27, 0
      %p237 = por %p235, %p236
      %p238 = scmp.ne.s32.totalorder %s226, %s227
      %p239 = scmp.eq.s32.totalorder %s28, 1
      %p240 = por %p238, %p239
      %p242 = scmp.ne.s32.totalorder %s227, %s241
      %p243 = scmp.eq.s32.totalorder %s28, 0
      %p244 = por %p242, %p243
      %s246 = sadd.s32 %s245, 1
      %p249 = scmp.eq.s32.totalorder %s22, 1
      %p250 = scmp.ne.s32.totalorder %s245, %s247
      %p251 = scmp.eq.s32.totalorder %s22, 0
      %p252 = por %p250, %p251
      %p253 = scmp.ne.s32.totalorder %s245, %s247
      %p254 = scmp.eq.s32.totalorder %s27, 1
      %p255 = por %p253, %p254
      %p256 = scmp.ne.s32.totalorder %s247, %s248
      %p257 = scmp.eq.s32.totalorder %s27, 0
      %p258 = por %p256, %p257
      %p259 = scmp.ne.s32.totalorder %s247, %s248
      %p260 = scmp.eq.s32.totalorder %s28, 1
      %p261 = por %p259, %p260
      %p263 = scmp.ne.s32.totalorder %s248, %s262
      %p264 = scmp.eq.s32.totalorder %s28, 0
      %p265 = por %p263, %p264
      %s267 = sadd.s32 %s266, 1
      %p270 = scmp.eq.s32.totalorder %s22, 1
      %p271 = scmp.ne.s32.totalorder %s266, %s268
      %p272 = scmp.eq.s32.totalorder %s22, 0
      %p273 = por %p271, %p272
      %p274 = scmp.ne.s32.totalorder %s266, %s268
      %p275 = scmp.eq.s32.totalorder %s27, 1
      %p276 = por %p274, %p275
      %p277 = scmp.ne.s32.totalorder %s268, %s269
      %p278 = scmp.eq.s32.totalorder %s27, 0
      %p279 = por %p277, %p278
      %p280 = scmp.ne.s32.totalorder %s268, %s269
      %p281 = scmp.eq.s32.totalorder %s28, 1
      %p282 = por %p280, %p281
      %p284 = scmp.ne.s32.totalorder %s269, %s283
      %p285 = scmp.eq.s32.totalorder %s28, 0
      %p286 = por %p284, %p285
      %s288 = sadd.s32 %s287, 1
      %p291 = scmp.eq.s32.totalorder %s22, 1
      %p292 = scmp.ne.s32.totalorder %s287, %s289
      %p293 = scmp.eq.s32.totalorder %s22, 0
      %p294 = por %p292, %p293
      %p295 = scmp.ne.s32.totalorder %s287, %s289
      %p296 = scmp.eq.s32.totalorder %s27, 1
      %p297 = por %p295, %p296
      %p298 = scmp.ne.s32.totalorder %s289, %s290
      %p299 = scmp.eq.s32.totalorder %s27, 0
      %p300 = por %p298, %p299
      %p301 = scmp.ne.s32.totalorder %s289, %s290
      %p302 = scmp.eq.s32.totalorder %s28, 1
      %p303 = por %p301, %p302
      %p305 = scmp.ne.s32.totalorder %s290, %s304
      %p306 = scmp.eq.s32.totalorder %s28, 0
      %p307 = por %p305, %p306
      %s308 = ssub.s32 %s22, %s29
      %p309 = scmp.eq.s32.totalorder %s308, 0
      %s311 = sadd.s32 %s310, 1
      %s312 = scalar_select %p309, %s310, %s311
      %p315 = pneg %p309
      %p316 = scmp.eq.s32.totalorder %s22, 1
      %p317 = por %p315, %p316
      %p318 = scmp.ne.s32.totalorder %s310, %s313
      %p319 = scmp.eq.s32.totalorder %s22, 0
      %p320 = por %p318, %p319
      %p321 = scmp.ne.s32.totalorder %s310, %s313
      %p322 = scmp.eq.s32.totalorder %s27, 1
      %p323 = por %p321, %p322
      %p324 = scmp.ne.s32.totalorder %s313, %s314
      %p325 = scmp.eq.s32.totalorder %s27, 0
      %p326 = por %p324, %p325
      %p327 = scmp.ne.s32.totalorder %s313, %s314
      %p328 = scmp.eq.s32.totalorder %s28, 1
      %p329 = por %p327, %p328
      %p331 = scmp.ne.s32.totalorder %s314, %s330
      %p332 = scmp.eq.s32.totalorder %s28, 0
      %p333 = por %p331, %p332
      %p334 = scmp.le.s32.totalorder 1, %s22
      %p335 = scmp.lt.s32.totalorder %s22, 3
      %p336 = pnand %p334, %p335
      %p337 = pneg %p336
      // Predicated region
      $region9: #{tpu_custom_call.1} parent=5 // pred_check
        _
      $region10: #{tpu_custom_call.1} parent=5 // pred_check_branch
        %339 = sbr.rel (%p336) target = $region12
      $region11: #{tpu_custom_call.1} parent=5 // pred_region
        %s340 = ssub.s32 %s22, 1
        // Predicated region
        $region13: #{tpu_custom_call.1} parent=11 // pred_check
          %p341 = pneg %p69
        $region14: #{tpu_custom_call.1} parent=11 // pred_check_branch
          %343 = sbr.rel (%p341) target = $region16
        $region15: #{tpu_custom_call.1} parent=11 // pred_region
          _
        $region16: #{tpu_custom_call.1} parent=11 // pred_fallthru
          _
        // Predicated region
        $region17: #{tpu_custom_call.1} parent=11 // pred_check
          %p344 = pneg %p90
        $region18: #{tpu_custom_call.1} parent=11 // pred_check_branch
          %346 = sbr.rel (%p344) target = $region20
        $region19: #{tpu_custom_call.1} parent=11 // pred_region
          _
        $region20: #{tpu_custom_call.1} parent=11 // pred_fallthru
          _
        // Predicated region
        $region21: #{tpu_custom_call.1} parent=11 // pred_check
          %p347 = pneg %p111
        $region22: #{tpu_custom_call.1} parent=11 // pred_check_branch
          %349 = sbr.rel (%p347) target = $region24
        $region23: #{tpu_custom_call.1} parent=11 // pred_region
          _
        $region24: #{tpu_custom_call.1} parent=11 // pred_fallthru
          _
        // Predicated region
        $region25: #{tpu_custom_call.1} parent=11 // pred_check
          %p350 = pneg %p132
        $region26: #{tpu_custom_call.1} parent=11 // pred_check_branch
          %352 = sbr.rel (%p350) target = $region28
        $region27: #{tpu_custom_call.1} parent=11 // pred_region
          _
        $region28: #{tpu_custom_call.1} parent=11 // pred_fallthru
          _
        // Predicated region
        $region29: #{tpu_custom_call.1} parent=11 // pred_check
          %p353 = pneg %p153
        $region30: #{tpu_custom_call.1} parent=11 // pred_check_branch
          %355 = sbr.rel (%p353) target = $region32
        $region31: #{tpu_custom_call.1} parent=11 // pred_region
          _
        $region32: #{tpu_custom_call.1} parent=11 // pred_fallthru
          _
        // Predicated region
        $region33: #{tpu_custom_call.1} parent=11 // pred_check
          %p356 = pneg %p174
        $region34: #{tpu_custom_call.1} parent=11 // pred_check_branch
          %358 = sbr.rel (%p356) target = $region36
        $region35: #{tpu_custom_call.1} parent=11 // pred_region
          _
        $region36: #{tpu_custom_call.1} parent=11 // pred_fallthru
          _
        // Predicated region
        $region37: #{tpu_custom_call.1} parent=11 // pred_check
          %p359 = pneg %p195
        $region38: #{tpu_custom_call.1} parent=11 // pred_check_branch
          %361 = sbr.rel (%p359) target = $region40
        $region39: #{tpu_custom_call.1} parent=11 // pred_region
          _
        $region40: #{tpu_custom_call.1} parent=11 // pred_fallthru
          _
        // Predicated region
        $region41: #{tpu_custom_call.1} parent=11 // pred_check
          %p362 = pneg %p216
        $region42: #{tpu_custom_call.1} parent=11 // pred_check_branch
          %364 = sbr.rel (%p362) target = $region44
        $region43: #{tpu_custom_call.1} parent=11 // pred_region
          _
        $region44: #{tpu_custom_call.1} parent=11 // pred_fallthru
          _
        // Predicated region
        $region45: #{tpu_custom_call.1} parent=11 // pred_check
          %p365 = pneg %p237
        $region46: #{tpu_custom_call.1} parent=11 // pred_check_branch
          %367 = sbr.rel (%p365) target = $region48
        $region47: #{tpu_custom_call.1} parent=11 // pred_region
          _
        $region48: #{tpu_custom_call.1} parent=11 // pred_fallthru
          _
        // Predicated region
        $region49: #{tpu_custom_call.1} parent=11 // pred_check
          %p368 = pneg %p258
        $region50: #{tpu_custom_call.1} parent=11 // pred_check_branch
          %370 = sbr.rel (%p368) target = $region52
        $region51: #{tpu_custom_call.1} parent=11 // pred_region
          _
        $region52: #{tpu_custom_call.1} parent=11 // pred_fallthru
          _
        // Predicated region
        $region53: #{tpu_custom_call.1} parent=11 // pred_check
          %p371 = pneg %p279
        $region54: #{tpu_custom_call.1} parent=11 // pred_check_branch
          %373 = sbr.rel (%p371) target = $region56
        $region55: #{tpu_custom_call.1} parent=11 // pred_region
          _
        $region56: #{tpu_custom_call.1} parent=11 // pred_fallthru
          _
        // Predicated region
        $region57: #{tpu_custom_call.1} parent=11 // pred_check
          %p374 = pneg %p300
        $region58: #{tpu_custom_call.1} parent=11 // pred_check_branch
          %376 = sbr.rel (%p374) target = $region60
        $region59: #{tpu_custom_call.1} parent=11 // pred_region
          _
        $region60: #{tpu_custom_call.1} parent=11 // pred_fallthru
          _
      $region12: #{tpu_custom_call.1} parent=5 // pred_fallthru
        _
      %p377 = scmp.lt.s32.totalorder %s22, 2
      // Predicated region
      $region61: #{tpu_custom_call.1} parent=5 // pred_check
        %p378 = pneg %p377
      $region62: #{tpu_custom_call.1} parent=5 // pred_check_branch
        %380 = sbr.rel (%p378) target = $region64
      $region63: #{tpu_custom_call.1} parent=5 // pred_region
        // Predicated region
        $region65: #{tpu_custom_call.1} parent=63 // pred_check
          %p381 = pneg %p42
        $region66: #{tpu_custom_call.1} parent=63 // pred_check_branch
          %383 = sbr.rel (%p381) target = $region68
        $region67: #{tpu_custom_call.1} parent=63 // pred_region
          %p384 = scmp.lt.s32.totalorder %s22, 1
          %s385 = scalar_select %p384, %s22, 1
          %s386 = smul.addr %s385, 8
          %s387 = scalar_lea.vmem %s0, %s386
        $region68: #{tpu_custom_call.1} parent=63 // pred_fallthru
          _
      $region64: #{tpu_custom_call.1} parent=5 // pred_fallthru
        _
      %p388 = scmp.le.s32.totalorder 1, %s22
      %p389 = scmp.lt.s32.totalorder %s22, 3
      %p390 = pnand %p388, %p389
      %p391 = pneg %p390
      // Predicated region
      $region69: #{tpu_custom_call.1} parent=5 // pred_check
        _
      $region70: #{tpu_custom_call.1} parent=5 // pred_check_branch
        %393 = sbr.rel (%p390) target = $region72
      $region71: #{tpu_custom_call.1} parent=5 // pred_region
        %s394 = ssub.s32 %s22, 1
        %p395 = scmp.lt.s32.totalorder %s27, 1
        %s396 = scalar_select %p395, %s27, 1
        %s397 = smul.addr %s396, 8
        %s398 = scalar_lea.vmem %s0, %s397
        %p399 = pneg %p48
        %p400 = pneg %p45
        %p401 = pneg %p69
        %p402 = pneg %p66
        %p403 = pneg %p90
        %p404 = pneg %p87
        %p405 = pneg %p111
        %p406 = pneg %p108
        %p407 = pneg %p132
        %p408 = pneg %p129
        %p409 = pneg %p153
        %p410 = pneg %p150
        %p411 = pneg %p174
        %p412 = pneg %p171
        %p413 = pneg %p195
        %p414 = pneg %p192
        %p415 = pneg %p216
        %p416 = pneg %p213
        %p417 = pneg %p237
        %p418 = pneg %p234
        %p419 = pneg %p258
        %p420 = pneg %p255
        %p421 = pneg %p279
        %p422 = pneg %p276
        %p423 = pneg %p300
        %p424 = pneg %p297
        %p425 = pneg %p326
        %p426 = pneg %p323
        %s427 = sand.u32 %s313, 1
        %s428 = scalar_lea.sflag [#allocation3], %s427
        %s429 = sand.u32 %s313, 1
        %s430 = smul.addr %s429, 2
        %s431 = scalar_lea.vmem [#allocation2], %s430
        %p432 = scmp.lt.s32.totalorder %s27, 1
        %s433 = scalar_select %p432, %s27, 1
        %s434 = smul.addr %s433, 8
        %s435 = scalar_lea.vmem %s0, %s434
        %v437 = vld [vmem:[%s435] sm:$0xff]
        %v438 = vld [vmem:[%s9] sm:$0x1]
        %v439 = vld [vmem:[%s10] sm:$0x1]
        %v440 = vld [vmem:[%s11] sm:$0x1]
        %v441 = vld [vmem:[%s12] sm:$0x1]
        %v442 = vld [vmem:[%s2] sm:$0x1]
        %v443 = vld [vmem:[%s4] sm:$0x1]
        %v444 = vld [vmem:[%s8] sm:$0x1]
        %vm445 = vcmask 261120
        %v446 = vsel %vm445, %v437, 0.0
        %447 = vadd.xlane.f32.xlu0 %v446
        %v448 = vpop.xlane.xlu0 %447
        %v449 = vrcp.pop 32.0
        %v450 = vmul.f32 %v448, %v449
        %v451 = vsub.f32 %v437, %v450
        %v452 = vmul.f32 %v451, %v451
        %v453 = vsel %vm445, %v452, 0.0
        %454 = vadd.xlane.f32.xlu0 %v453
        %v455 = vpop.xlane.xlu0 %454
        %v456 = vmul.f32 %v455, 0.032258064
        %v457 = vrsqrt.pop %v456
        %v458 = vmul.f32 %v456, %v457
        %vm459 = vcmp.eq.f32.partialorder %v456, inf
        %v460 = vsel %vm459, %v456, %v458
        %vm461 = vcmp.eq.f32.partialorder %v456, 0.0
        %v462 = vand.u32 %v456, 2147483648
        %v463 = vsel %vm461, %v462, %v460
        %v464 = vadd.f32 %v463, 1e-06
        %v465 = vrcp.pop %v464
        %v466 = vmul.f32 %v451, %v465
        %v468 = vlaneseq
        %v469 = vshrl.u32 %v468, 7
        %v470 = vsub.s32 0, %v469
        %v471 = vrot.slane %v438, %v470
        %v473 = vmul.f32 %v471, %v466
        %v475 = vlaneseq
        %v476 = vshrl.u32 %v475, 7
        %v477 = vsub.s32 0, %v476
        %v478 = vrot.slane %v439, %v477
        %v480 = vadd.f32 %v473, %v478
        %v481 = vpack.c.bf16 %v480, %v480
        %v482 = vld [vmem:[%s1] sm:$0xf]
        %v483 = vld [vmem:[%s1 + $0x4] sm:$0xf]
        %v484 = vld [vmem:[%s1 + $0x8] sm:$0xf]
        %v485 = vld [vmem:[%s1 + $0xc] sm:$0xf]
        %v487 = vlaneseq
        %v488 = vshrl.u32 %v487, 7
        %v489 = vsub.s32 0, %v488
        %v490 = vrot.slane %v442, %v489
        %v496 = vunpack.c.l.b16 %v482
        %v497 = vunpack.c.l.b16 %v483
        %v498 = vunpack.c.l.b16 %v484
        %v499 = vunpack.c.l.b16 %v485
        %v500 = vpack.c.b16 %v497, %v496
        %v501 = vpack.c.b16 %v499, %v498
        %v505 = vsel %vm445, %v481, 0
        %507 = vmatprep.subr.bf16.mxu0 0
        %508 = vmatpush1.bf16.msra.mxu0 %v500
        %509 = vmatprep.subr.bf16.mxu0 0
        %510 = vmatpush1.bf16.msra.mxu0 %v501
        %511 = vmatprep.subr.bf16.mxu0 0
        %512 = vmatpush1.bf16.msra.mxu0 0
        %513 = vmatprep.subr.bf16.mxu0 0
        %514 = vmatpush1.bf16.msra.mxu0 0
        %515 = vmatprep.subr.bf16.mxu0 0
        %516 = vmatpush1.bf16.msra.mxu0 0
        %517 = vmatprep.subr.bf16.mxu0 0
        %518 = vmatpush1.bf16.msra.mxu0 0
        %519 = vmatprep.subr.bf16.mxu0 0
        %520 = vmatpush1.bf16.msra.mxu0 0
        %521 = vmatprep.subr.bf16.mxu0 0
        %522 = vmatpush1.bf16.msra.mxu0 0
        %523 = vmatprep.subr.bf16.mxu0 0
        %524 = vmatpush1.bf16.msra.mxu0 0
        %525 = vmatprep.subr.bf16.mxu0 0
        %526 = vmatpush1.bf16.msra.mxu0 0
        %527 = vmatprep.subr.bf16.mxu0 0
        %528 = vmatpush1.bf16.msra.mxu0 0
        %529 = vmatprep.subr.bf16.mxu0 0
        %530 = vmatpush1.bf16.msra.mxu0 0
        %531 = vmatprep.subr.bf16.mxu0 0
        %532 = vmatpush1.bf16.msra.mxu0 0
        %533 = vmatprep.subr.bf16.mxu0 0
        %534 = vmatpush1.bf16.msra.mxu0 0
        %535 = vmatprep.subr.bf16.mxu0 0
        %536 = vmatpush1.bf16.msra.mxu0 0
        %537 = vmatprep.subr.bf16.mxu0 0
        %538 = vmatpush1.bf16.msra.mxu0 0
        %539 = vmatprep.mubr.bf16.mxu0 0
        %540 = vmatmul.mubr.bf16.gmra.mrb[0].mxu0 %v505
        %v541 = vpop.f32.mrb[0].mxu0
        %v542 = vadd.f32 %v490, %v541
        %v543 = vpop.f32.mrb[0].mxu0
        %v544 = vpop.f32.mrb[0].mxu0
        %v545 = vpop.f32.mrb[0].mxu0
        %546 = vdwg.mxu0
        %548 = vrot.lane.b32.xlu0 %v542, 120
        %v549 = vpop.permute.xlu0 %548
        %551 = vrot.lane.b32.xlu0 %v542, 112
        %v552 = vpop.permute.xlu0 %551
        %554 = vrot.lane.b32.xlu0 %v542, 104
        %v555 = vpop.permute.xlu0 %554
        %v557 = vpack.c.bf16 %v542, %v542
        %v558 = vpack.c.bf16 %v549, %v549
        %v559 = vpack.c.bf16 %v552, %v552
        %v560 = vpack.c.bf16 %v555, %v555
        %562 = vrot.lane.b32.xlu0 %v557, 96
        %v563 = vpop.permute.xlu0 %562
        %vm564 = vcmask 64512
        %v566 = vsel %vm564, %v557, 0
        %v569 = vsel %vm564, %v563, 0
        %571 = vmatprep.subr.bf16.mxu0 0
        %572 = vmatpush1.bf16.xpose.msra.mxu0 %v569
        %573 = vmatprep.subr.bf16.mxu0 0
        %574 = vmatpush1.bf16.xpose.msra.mxu0 0
        %575 = vmatprep.subr.bf16.mxu0 0
        %576 = vmatpush1.bf16.xpose.msra.mxu0 0
        %577 = vmatprep.subr.bf16.mxu0 0
        %578 = vmatpush1.bf16.xpose.msra.mxu0 0
        %579 = vmatprep.subr.bf16.mxu0 0
        %580 = vmatpush1.bf16.xpose.msra.mxu0 0
        %581 = vmatprep.subr.bf16.mxu0 0
        %582 = vmatpush1.bf16.xpose.msra.mxu0 0
        %583 = vmatprep.subr.bf16.mxu0 0
        %584 = vmatpush1.bf16.xpose.msra.mxu0 0
        %585 = vmatprep.subr.bf16.mxu0 0
        %586 = vmatpush1.bf16.xpose.msra.mxu0 0
        %587 = vmatprep.subr.bf16.mxu0 0
        %588 = vmatpush1.bf16.xpose.msra.mxu0 0
        %589 = vmatprep.subr.bf16.mxu0 0
        %590 = vmatpush1.bf16.xpose.msra.mxu0 0
        %591 = vmatprep.subr.bf16.mxu0 0
        %592 = vmatpush1.bf16.xpose.msra.mxu0 0
        %593 = vmatprep.subr.bf16.mxu0 0
        %594 = vmatpush1.bf16.xpose.msra.mxu0 0
        %595 = vmatprep.subr.bf16.mxu0 0
        %596 = vmatpush1.bf16.xpose.msra.mxu0 0
        %597 = vmatprep.subr.bf16.mxu0 0
        %598 = vmatpush1.bf16.xpose.msra.mxu0 0
        %599 = vmatprep.subr.bf16.mxu0 0
        %600 = vmatpush1.bf16.xpose.msra.mxu0 0
        %601 = vmatprep.subr.bf16.mxu0 0
        %602 = vmatpush1.bf16.xpose.msra.mxu0 0
        %603 = vmatprep.mubr.bf16.mxu0 0
        %604 = vmatmul.mubr.bf16.gmra.mrb[0].mxu0 %v566
        %v605 = vpop.f32.mrb[0].mxu0
        %v606 = vadd.f32 0.0, %v605
        %v607 = vpop.f32.mrb[0].mxu0
        %v608 = vpop.f32.mrb[0].mxu0
        %v609 = vpop.f32.mrb[0].mxu0
        %610 = vdwg.mxu0
        %612 = vrot.lane.b32.xlu0 %v558, 96
        %v613 = vpop.permute.xlu0 %612
        %v615 = vsel %vm564, %v558, 0
        %v618 = vsel %vm564, %v613, 0
        %620 = vmatprep.subr.bf16.mxu0 0
        %621 = vmatpush1.bf16.xpose.msra.mxu0 %v618
        %622 = vmatprep.subr.bf16.mxu0 0
        %623 = vmatpush1.bf16.xpose.msra.mxu0 0
        %624 = vmatprep.subr.bf16.mxu0 0
        %625 = vmatpush1.bf16.xpose.msra.mxu0 0
        %626 = vmatprep.subr.bf16.mxu0 0
        %627 = vmatpush1.bf16.xpose.msra.mxu0 0
        %628 = vmatprep.subr.bf16.mxu0 0
        %629 = vmatpush1.bf16.xpose.msra.mxu0 0
        %630 = vmatprep.subr.bf16.mxu0 0
        %631 = vmatpush1.bf16.xpose.msra.mxu0 0
        %632 = vmatprep.subr.bf16.mxu0 0
        %633 = vmatpush1.bf16.xpose.msra.mxu0 0
        %634 = vmatprep.subr.bf16.mxu0 0
        %635 = vmatpush1.bf16.xpose.msra.mxu0 0
        %636 = vmatprep.subr.bf16.mxu0 0
        %637 = vmatpush1.bf16.xpose.msra.mxu0 0
        %638 = vmatprep.subr.bf16.mxu0 0
        %639 = vmatpush1.bf16.xpose.msra.mxu0 0
        %640 = vmatprep.subr.bf16.mxu0 0
        %641 = vmatpush1.bf16.xpose.msra.mxu0 0
        %642 = vmatprep.subr.bf16.mxu0 0
        %643 = vmatpush1.bf16.xpose.msra.mxu0 0
        %644 = vmatprep.subr.bf16.mxu0 0
        %645 = vmatpush1.bf16.xpose.msra.mxu0 0
        %646 = vmatprep.subr.bf16.mxu0 0
        %647 = vmatpush1.bf16.xpose.msra.mxu0 0
        %648 = vmatprep.subr.bf16.mxu0 0
        %649 = vmatpush1.bf16.xpose.msra.mxu0 0
        %650 = vmatprep.subr.bf16.mxu0 0
        %651 = vmatpush1.bf16.xpose.msra.mxu0 0
        %652 = vmatprep.mubr.bf16.mxu0 0
        %653 = vmatmul.mubr.bf16.gmra.mrb[0].mxu0 %v615
        %v654 = vpop.f32.mrb[0].mxu0
        %v655 = vadd.f32 0.0, %v654
        %v656 = vpop.f32.mrb[0].mxu0
        %v657 = vpop.f32.mrb[0].mxu0
        %v658 = vpop.f32.mrb[0].mxu0
        %659 = vdwg.mxu0
        %661 = vrot.lane.b32.xlu0 %v559, 96
        %v662 = vpop.permute.xlu0 %661
        %v664 = vsel %vm564, %v559, 0
        %v667 = vsel %vm564, %v662, 0
        %669 = vmatprep.subr.bf16.mxu0 0
        %670 = vmatpush1.bf16.xpose.msra.mxu0 %v667
        %671 = vmatprep.subr.bf16.mxu0 0
        %672 = vmatpush1.bf16.xpose.msra.mxu0 0
        %673 = vmatprep.subr.bf16.mxu0 0
        %674 = vmatpush1.bf16.xpose.msra.mxu0 0
        %675 = vmatprep.subr.bf16.mxu0 0
        %676 = vmatpush1.bf16.xpose.msra.mxu0 0
        %677 = vmatprep.subr.bf16.mxu0 0
        %678 = vmatpush1.bf16.xpose.msra.mxu0 0
        %679 = vmatprep.subr.bf16.mxu0 0
        %680 = vmatpush1.bf16.xpose.msra.mxu0 0
        %681 = vmatprep.subr.bf16.mxu0 0
        %682 = vmatpush1.bf16.xpose.msra.mxu0 0
        %683 = vmatprep.subr.bf16.mxu0 0
        %684 = vmatpush1.bf16.xpose.msra.mxu0 0
        %685 = vmatprep.subr.bf16.mxu0 0
        %686 = vmatpush1.bf16.xpose.msra.mxu0 0
        %687 = vmatprep.subr.bf16.mxu0 0
        %688 = vmatpush1.bf16.xpose.msra.mxu0 0
        %689 = vmatprep.subr.bf16.mxu0 0
        %690 = vmatpush1.bf16.xpose.msra.mxu0 0
        %691 = vmatprep.subr.bf16.mxu0 0
        %692 = vmatpush1.bf16.xpose.msra.mxu0 0
        %693 = vmatprep.subr.bf16.mxu0 0
        %694 = vmatpush1.bf16.xpose.msra.mxu0 0
        %695 = vmatprep.subr.bf16.mxu0 0
        %696 = vmatpush1.bf16.xpose.msra.mxu0 0
        %697 = vmatprep.subr.bf16.mxu0 0
        %698 = vmatpush1.bf16.xpose.msra.mxu0 0
        %699 = vmatprep.subr.bf16.mxu0 0
        %700 = vmatpush1.bf16.xpose.msra.mxu0 0
        %701 = vmatprep.mubr.bf16.mxu0 0
        %702 = vmatmul.mubr.bf16.gmra.mrb[0].mxu0 %v664
        %v703 = vpop.f32.mrb[0].mxu0
        %v704 = vadd.f32 0.0, %v703
        %v705 = vpop.f32.mrb[0].mxu0
        %v706 = vpop.f32.mrb[0].mxu0
        %v707 = vpop.f32.mrb[0].mxu0
        %708 = vdwg.mxu0
        %710 = vrot.lane.b32.xlu0 %v560, 96
        %v711 = vpop.permute.xlu0 %710
        %v713 = vsel %vm564, %v560, 0
        %v716 = vsel %vm564, %v711, 0
        %718 = vmatprep.subr.bf16.mxu0 0
        %719 = vmatpush1.bf16.xpose.msra.mxu0 %v716
        %720 = vmatprep.subr.bf16.mxu0 0
        %721 = vmatpush1.bf16.xpose.msra.mxu0 0
        %722 = vmatprep.subr.bf16.mxu0 0
        %723 = vmatpush1.bf16.xpose.msra.mxu0 0
        %724 = vmatprep.subr.bf16.mxu0 0
        %725 = vmatpush1.bf16.xpose.msra.mxu0 0
        %726 = vmatprep.subr.bf16.mxu0 0
        %727 = vmatpush1.bf16.xpose.msra.mxu0 0
        %728 = vmatprep.subr.bf16.mxu0 0
        %729 = vmatpush1.bf16.xpose.msra.mxu0 0
        %730 = vmatprep.subr.bf16.mxu0 0
        %731 = vmatpush1.bf16.xpose.msra.mxu0 0
        %732 = vmatprep.subr.bf16.mxu0 0
        %733 = vmatpush1.bf16.xpose.msra.mxu0 0
        %734 = vmatprep.subr.bf16.mxu0 0
        %735 = vmatpush1.bf16.xpose.msra.mxu0 0
        %736 = vmatprep.subr.bf16.mxu0 0
        %737 = vmatpush1.bf16.xpose.msra.mxu0 0
        %738 = vmatprep.subr.bf16.mxu0 0
        %739 = vmatpush1.bf16.xpose.msra.mxu0 0
        %740 = vmatprep.subr.bf16.mxu0 0
        %741 = vmatpush1.bf16.xpose.msra.mxu0 0
        %742 = vmatprep.subr.bf16.mxu0 0
        %743 = vmatpush1.bf16.xpose.msra.mxu0 0
        %744 = vmatprep.subr.bf16.mxu0 0
        %745 = vmatpush1.bf16.xpose.msra.mxu0 0
        %746 = vmatprep.subr.bf16.mxu0 0
        %747 = vmatpush1.bf16.xpose.msra.mxu0 0
        %748 = vmatprep.subr.bf16.mxu0 0
        %749 = vmatpush1.bf16.xpose.msra.mxu0 0
        %750 = vmatprep.mubr.bf16.mxu0 0
        %751 = vmatmul.mubr.bf16.gmra.mrb[0].mxu0 %v713
        %v752 = vpop.f32.mrb[0].mxu0
        %v753 = vadd.f32 0.0, %v752
        %v754 = vpop.f32.mrb[0].mxu0
        %v755 = vpop.f32.mrb[0].mxu0
        %v756 = vpop.f32.mrb[0].mxu0
        %757 = vdwg.mxu0
        %v758 = vsel %vm564, %v606, -inf
        %759 = vmax.xlane.f32.xlu0 %v758
        %v760 = vpop.xlane.xlu0 %759
        %v761 = vsel %vm564, %v655, -inf
        %762 = vmax.xlane.f32.xlu0 %v761
        %v763 = vpop.xlane.xlu0 %762
        %v764 = vsel %vm564, %v704, -inf
        %765 = vmax.xlane.f32.xlu0 %v764
        %v766 = vpop.xlane.xlu0 %765
        %v767 = vsel %vm564, %v753, -inf
        %768 = vmax.xlane.f32.xlu0 %v767
        %v769 = vpop.xlane.xlu0 %768
        %v770 = vsub.f32 %v606, %v760
        %v771 = vsub.f32 %v655, %v763
        %v772 = vsub.f32 %v704, %v766
        %v773 = vsub.f32 %v753, %v769
        %v774 = vmul.f32 %v770, 1.442695
        %v775 = vpow.pop %v774
        %v776 = vmul.f32 %v771, 1.442695
        %v777 = vpow.pop %v776
        %v778 = vmul.f32 %v772, 1.442695
        %v779 = vpow.pop %v778
        %v780 = vmul.f32 %v773, 1.442695
        %v781 = vpow.pop %v780
        %v782 = vsel %vm564, %v775, 0.0
        %783 = vadd.xlane.f32.xlu0 %v782
        %v784 = vpop.xlane.xlu0 %783
        %v785 = vsel %vm564, %v777, 0.0
        %786 = vadd.xlane.f32.xlu0 %v785
        %v787 = vpop.xlane.xlu0 %786
        %v788 = vsel %vm564, %v779, 0.0
        %789 = vadd.xlane.f32.xlu0 %v788
        %v790 = vpop.xlane.xlu0 %789
        %v791 = vsel %vm564, %v781, 0.0
        %792 = vadd.xlane.f32.xlu0 %v791
        %v793 = vpop.xlane.xlu0 %792
        %v794 = vrcp.pop %v784
        %v795 = vrcp.pop %v787
        %v796 = vrcp.pop %v790
        %v797 = vrcp.pop %v793
        %v798 = vmul.f32 %v775, %v794
        %v799 = vmul.f32 %v777, %v795
        %v800 = vmul.f32 %v779, %v796
        %v801 = vmul.f32 %v781, %v797
        %v802 = vpack.c.bf16 %v798, %v798
        %v803 = vpack.c.bf16 %v799, %v799
        %v804 = vpack.c.bf16 %v800, %v800
        %v805 = vpack.c.bf16 %v801, %v801
        %806 = vrot.lane.b32.xlu0 %v557, 64
        %v807 = vpop.permute.xlu0 %806
        %v809 = vsel %vm564, %v802, 0
        %vm811 = vcmask 1043456
        %v813 = vsel %vm811, %v807, 0
        %815 = vmatprep.subr.bf16.mxu0 0
        %816 = vmatpush1.bf16.msra.mxu0 %v813
        %817 = vmatprep.subr.bf16.mxu0 0
        %818 = vmatpush1.bf16.msra.mxu0 0
        %819 = vmatprep.subr.bf16.mxu0 0
        %820 = vmatpush1.bf16.msra.mxu0 0
        %821 = vmatprep.subr.bf16.mxu0 0
        %822 = vmatpush1.bf16.msra.mxu0 0
        %823 = vmatprep.subr.bf16.mxu0 0
        %824 = vmatpush1.bf16.msra.mxu0 0
        %825 = vmatprep.subr.bf16.mxu0 0
        %826 = vmatpush1.bf16.msra.mxu0 0
        %827 = vmatprep.subr.bf16.mxu0 0
        %828 = vmatpush1.bf16.msra.mxu0 0
        %829 = vmatprep.subr.bf16.mxu0 0
        %830 = vmatpush1.bf16.msra.mxu0 0
        %831 = vmatprep.subr.bf16.mxu0 0
        %832 = vmatpush1.bf16.msra.mxu0 0
        %833 = vmatprep.subr.bf16.mxu0 0
        %834 = vmatpush1.bf16.msra.mxu0 0
        %835 = vmatprep.subr.bf16.mxu0 0
        %836 = vmatpush1.bf16.msra.mxu0 0
        %837 = vmatprep.subr.bf16.mxu0 0
        %838 = vmatpush1.bf16.msra.mxu0 0
        %839 = vmatprep.subr.bf16.mxu0 0
        %840 = vmatpush1.bf16.msra.mxu0 0
        %841 = vmatprep.subr.bf16.mxu0 0
        %842 = vmatpush1.bf16.msra.mxu0 0
        %843 = vmatprep.subr.bf16.mxu0 0
        %844 = vmatpush1.bf16.msra.mxu0 0
        %845 = vmatprep.subr.bf16.mxu0 0
        %846 = vmatpush1.bf16.msra.mxu0 0
        %847 = vmatprep.mubr.bf16.mxu0 0
        %848 = vmatmul.mubr.bf16.gmra.mrb[0].mxu0 %v809
        %v849 = vpop.f32.mrb[0].mxu0
        %v850 = vadd.f32 0.0, %v849
        %v851 = vpop.f32.mrb[0].mxu0
        %v852 = vpop.f32.mrb[0].mxu0
        %v853 = vpop.f32.mrb[0].mxu0
        %854 = vdwg.mxu0
        %855 = vrot.lane.b32.xlu0 %v558, 64
        %v856 = vpop.permute.xlu0 %855
        %v858 = vsel %vm564, %v803, 0
        %v861 = vsel %vm811, %v856, 0
        %863 = vmatprep.subr.bf16.mxu0 0
        %864 = vmatpush1.bf16.msra.mxu0 %v861
        %865 = vmatprep.subr.bf16.mxu0 0
        %866 = vmatpush1.bf16.msra.mxu0 0
        %867 = vmatprep.subr.bf16.mxu0 0
        %868 = vmatpush1.bf16.msra.mxu0 0
        %869 = vmatprep.subr.bf16.mxu0 0
        %870 = vmatpush1.bf16.msra.mxu0 0
        %871 = vmatprep.subr.bf16.mxu0 0
        %872 = vmatpush1.bf16.msra.mxu0 0
        %873 = vmatprep.subr.bf16.mxu0 0
        %874 = vmatpush1.bf16.msra.mxu0 0
        %875 = vmatprep.subr.bf16.mxu0 0
        %876 = vmatpush1.bf16.msra.mxu0 0
        %877 = vmatprep.subr.bf16.mxu0 0
        %878 = vmatpush1.bf16.msra.mxu0 0
        %879 = vmatprep.subr.bf16.mxu0 0
        %880 = vmatpush1.bf16.msra.mxu0 0
        %881 = vmatprep.subr.bf16.mxu0 0
        %882 = vmatpush1.bf16.msra.mxu0 0
        %883 = vmatprep.subr.bf16.mxu0 0
        %884 = vmatpush1.bf16.msra.mxu0 0
        %885 = vmatprep.subr.bf16.mxu0 0
        %886 = vmatpush1.bf16.msra.mxu0 0
        %887 = vmatprep.subr.bf16.mxu0 0
        %888 = vmatpush1.bf16.msra.mxu0 0
        %889 = vmatprep.subr.bf16.mxu0 0
        %890 = vmatpush1.bf16.msra.mxu0 0
        %891 = vmatprep.subr.bf16.mxu0 0
        %892 = vmatpush1.bf16.msra.mxu0 0
        %893 = vmatprep.subr.bf16.mxu0 0
        %894 = vmatpush1.bf16.msra.mxu0 0
        %895 = vmatprep.mubr.bf16.mxu0 0
        %896 = vmatmul.mubr.bf16.gmra.mrb[0].mxu0 %v858
        %v897 = vpop.f32.mrb[0].mxu0
        %v898 = vadd.f32 0.0, %v897
        %v899 = vpop.f32.mrb[0].mxu0
        %v900 = vpop.f32.mrb[0].mxu0
        %v901 = vpop.f32.mrb[0].mxu0
        %902 = vdwg.mxu0
        %903 = vrot.lane.b32.xlu0 %v559, 64
        %v904 = vpop.permute.xlu0 %903
        %v906 = vsel %vm564, %v804, 0
        %v909 = vsel %vm811, %v904, 0
        %911 = vmatprep.subr.bf16.mxu0 0
        %912 = vmatpush1.bf16.msra.mxu0 %v909
        %913 = vmatprep.subr.bf16.mxu0 0
        %914 = vmatpush1.bf16.msra.mxu0 0
        %915 = vmatprep.subr.bf16.mxu0 0
        %916 = vmatpush1.bf16.msra.mxu0 0
        %917 = vmatprep.subr.bf16.mxu0 0
        %918 = vmatpush1.bf16.msra.mxu0 0
        %919 = vmatprep.subr.bf16.mxu0 0
        %920 = vmatpush1.bf16.msra.mxu0 0
        %921 = vmatprep.subr.bf16.mxu0 0
        %922 = vmatpush1.bf16.msra.mxu0 0
        %923 = vmatprep.subr.bf16.mxu0 0
        %924 = vmatpush1.bf16.msra.mxu0 0
        %925 = vmatprep.subr.bf16.mxu0 0
        %926 = vmatpush1.bf16.msra.mxu0 0
        %927 = vmatprep.subr.bf16.mxu0 0
        %928 = vmatpush1.bf16.msra.mxu0 0
        %929 = vmatprep.subr.bf16.mxu0 0
        %930 = vmatpush1.bf16.msra.mxu0 0
        %931 = vmatprep.subr.bf16.mxu0 0
        %932 = vmatpush1.bf16.msra.mxu0 0
        %933 = vmatprep.subr.bf16.mxu0 0
        %934 = vmatpush1.bf16.msra.mxu0 0
        %935 = vmatprep.subr.bf16.mxu0 0
        %936 = vmatpush1.bf16.msra.mxu0 0
        %937 = vmatprep.subr.bf16.mxu0 0
        %938 = vmatpush1.bf16.msra.mxu0 0
        %939 = vmatprep.subr.bf16.mxu0 0
        %940 = vmatpush1.bf16.msra.mxu0 0
        %941 = vmatprep.subr.bf16.mxu0 0
        %942 = vmatpush1.bf16.msra.mxu0 0
        %943 = vmatprep.mubr.bf16.mxu0 0
        %944 = vmatmul.mubr.bf16.gmra.mrb[0].mxu0 %v906
        %v945 = vpop.f32.mrb[0].mxu0
        %v946 = vadd.f32 0.0, %v945
        %v947 = vpop.f32.mrb[0].mxu0
        %v948 = vpop.f32.mrb[0].mxu0
        %v949 = vpop.f32.mrb[0].mxu0
        %950 = vdwg.mxu0
        %951 = vrot.lane.b32.xlu0 %v560, 64
        %v952 = vpop.permute.xlu0 %951
        %v954 = vsel %vm564, %v805, 0
        %v957 = vsel %vm811, %v952, 0
        %959 = vmatprep.subr.bf16.mxu0 0
        %960 = vmatpush1.bf16.msra.mxu0 %v957
        %961 = vmatprep.subr.bf16.mxu0 0
        %962 = vmatpush1.bf16.msra.mxu0 0
        %963 = vmatprep.subr.bf16.mxu0 0
        %964 = vmatpush1.bf16.msra.mxu0 0
        %965 = vmatprep.subr.bf16.mxu0 0
        %966 = vmatpush1.bf16.msra.mxu0 0
        %967 = vmatprep.subr.bf16.mxu0 0
        %968 = vmatpush1.bf16.msra.mxu0 0
        %969 = vmatprep.subr.bf16.mxu0 0
        %970 = vmatpush1.bf16.msra.mxu0 0
        %971 = vmatprep.subr.bf16.mxu0 0
        %972 = vmatpush1.bf16.msra.mxu0 0
        %973 = vmatprep.subr.bf16.mxu0 0
        %974 = vmatpush1.bf16.msra.mxu0 0
        %975 = vmatprep.subr.bf16.mxu0 0
        %976 = vmatpush1.bf16.msra.mxu0 0
        %977 = vmatprep.subr.bf16.mxu0 0
        %978 = vmatpush1.bf16.msra.mxu0 0
        %979 = vmatprep.subr.bf16.mxu0 0
        %980 = vmatpush1.bf16.msra.mxu0 0
        %981 = vmatprep.subr.bf16.mxu0 0
        %982 = vmatpush1.bf16.msra.mxu0 0
        %983 = vmatprep.subr.bf16.mxu0 0
        %984 = vmatpush1.bf16.msra.mxu0 0
        %985 = vmatprep.subr.bf16.mxu0 0
        %986 = vmatpush1.bf16.msra.mxu0 0
        %987 = vmatprep.subr.bf16.mxu0 0
        %988 = vmatpush1.bf16.msra.mxu0 0
        %989 = vmatprep.subr.bf16.mxu0 0
        %990 = vmatpush1.bf16.msra.mxu0 0
        %991 = vmatprep.mubr.bf16.mxu0 0
        %992 = vmatmul.mubr.bf16.gmra.mrb[0].mxu0 %v954
        %v993 = vpop.f32.mrb[0].mxu0
        %v994 = vadd.f32 0.0, %v993
        %v995 = vpop.f32.mrb[0].mxu0
        %v996 = vpop.f32.mrb[0].mxu0
        %v997 = vpop.f32.mrb[0].mxu0
        %998 = vdwg.mxu0
        %1000 = vrot.lane.b32.xlu0 %v898, 8
        %v1001 = vpop.permute.xlu0 %1000
        %1004 = vrot.lane.b32.xlu0 %v946, 16
        %v1005 = vpop.permute.xlu0 %1004
        %1008 = vrot.lane.b32.xlu0 %v994, 24
        %v1009 = vpop.permute.xlu0 %1008
        %v1011 = vsel %vm564, %v850, %v1001
        %vm1012 = vcmask 130048
        %v1013 = vsel %vm1012, %v1011, %v1005
        %vm1014 = vcmask 195584
        %v1015 = vsel %vm1014, %v1013, %v1009
        %v1016 = vpack.c.bf16 %v1015, %v1015
        %v1017 = vld [vmem:[%s3] sm:$0xf]
        %v1018 = vld [vmem:[%s3 + $0x4] sm:$0xf]
        %v1019 = vld [vmem:[%s3 + $0x8] sm:$0xf]
        %v1020 = vld [vmem:[%s3 + $0xc] sm:$0xf]
        %v1025 = vunpack.c.l.b16 %v1017
        %v1026 = vunpack.c.l.b16 %v1018
        %v1027 = vunpack.c.l.b16 %v1019
        %v1028 = vunpack.c.l.b16 %v1020
        %v1029 = vpack.c.b16 %v1026, %v1025
        %v1030 = vpack.c.b16 %v1028, %v1027
        %v1034 = vsel %vm445, %v1016, 0
        %1036 = vmatprep.subr.bf16.mxu0 0
        %1037 = vmatpush1.bf16.msra.mxu0 %v1029
        %1038 = vmatprep.subr.bf16.mxu0 0
        %1039 = vmatpush1.bf16.msra.mxu0 %v1030
        %1040 = vmatprep.subr.bf16.mxu0 0
        %1041 = vmatpush1.bf16.msra.mxu0 0
        %1042 = vmatprep.subr.bf16.mxu0 0
        %1043 = vmatpush1.bf16.msra.mxu0 0
        %1044 = vmatprep.subr.bf16.mxu0 0
        %1045 = vmatpush1.bf16.msra.mxu0 0
        %1046 = vmatprep.subr.bf16.mxu0 0
        %1047 = vmatpush1.bf16.msra.mxu0 0
        %1048 = vmatprep.subr.bf16.mxu0 0
        %1049 = vmatpush1.bf16.msra.mxu0 0
        %1050 = vmatprep.subr.bf16.mxu0 0
        %1051 = vmatpush1.bf16.msra.mxu0 0
        %1052 = vmatprep.subr.bf16.mxu0 0
        %1053 = vmatpush1.bf16.msra.mxu0 0
        %1054 = vmatprep.subr.bf16.mxu0 0
        %1055 = vmatpush1.bf16.msra.mxu0 0
        %1056 = vmatprep.subr.bf16.mxu0 0
        %1057 = vmatpush1.bf16.msra.mxu0 0
        %1058 = vmatprep.subr.bf16.mxu0 0
        %1059 = vmatpush1.bf16.msra.mxu0 0
        %1060 = vmatprep.subr.bf16.mxu0 0
        %1061 = vmatpush1.bf16.msra.mxu0 0
        %1062 = vmatprep.subr.bf16.mxu0 0
        %1063 = vmatpush1.bf16.msra.mxu0 0
        %1064 = vmatprep.subr.bf16.mxu0 0
        %1065 = vmatpush1.bf16.msra.mxu0 0
        %1066 = vmatprep.subr.bf16.mxu0 0
        %1067 = vmatpush1.bf16.msra.mxu0 0
        %1068 = vmatprep.mubr.bf16.mxu0 0
        %1069 = vmatmul.mubr.bf16.gmra.mrb[0].mxu0 %v1034
        %v1070 = vpop.f32.mrb[0].mxu0
        %v1071 = vadd.f32 0.0, %v1070
        %v1072 = vpop.f32.mrb[0].mxu0
        %v1073 = vpop.f32.mrb[0].mxu0
        %v1074 = vpop.f32.mrb[0].mxu0
        %1075 = vdwg.mxu0
        %v1076 = vadd.f32 %v437, %v1071
        %v1078 = vlaneseq
        %v1079 = vshrl.u32 %v1078, 7
        %v1080 = vsub.s32 0, %v1079
        %v1081 = vrot.slane %v443, %v1080
        %v1083 = vadd.f32 %v1076, %v1081
        %v1084 = vsel %vm445, %v1083, 0.0
        %1085 = vadd.xlane.f32.xlu0 %v1084
        %v1086 = vpop.xlane.xlu0 %1085
        %v1087 = vmul.f32 %v1086, %v449
        %v1088 = vsub.f32 %v1083, %v1087
        %v1089 = vmul.f32 %v1088, %v1088
        %v1090 = vsel %vm445, %v1089, 0.0
        %1091 = vadd.xlane.f32.xlu0 %v1090
        %v1092 = vpop.xlane.xlu0 %1091
        %v1093 = vmul.f32 %v1092, 0.032258064
        %v1094 = vrsqrt.pop %v1093
        %v1095 = vmul.f32 %v1093, %v1094
        %vm1096 = vcmp.eq.f32.partialorder %v1093, inf
        %v1097 = vsel %vm1096, %v1093, %v1095
        %vm1098 = vcmp.eq.f32.partialorder %v1093, 0.0
        %v1099 = vand.u32 %v1093, 2147483648
        %v1100 = vsel %vm1098, %v1099, %v1097
        %v1101 = vadd.f32 %v1100, 1e-06
        %v1102 = vrcp.pop %v1101
        %v1103 = vmul.f32 %v1088, %v1102
        %v1105 = vlaneseq
        %v1106 = vshrl.u32 %v1105, 7
        %v1107 = vsub.s32 0, %v1106
        %v1108 = vrot.slane %v440, %v1107
        %v1110 = vmul.f32 %v1108, %v1103
        %v1112 = vlaneseq
        %v1113 = vshrl.u32 %v1112, 7
        %v1114 = vsub.s32 0, %v1113
        %v1115 = vrot.slane %v441, %v1114
        %v1117 = vadd.f32 %v1110, %v1115
        %v1118 = vpack.c.bf16 %v1117, %v1117
        %v1119 = vld [vmem:[%s5] sm:$0xf]
        %v1120 = vld [vmem:[%s5 + $0x4] sm:$0xf]
        %v1121 = vld [vmem:[%s5 + $0x8] sm:$0xf]
        %v1122 = vld [vmem:[%s5 + $0xc] sm:$0xf]
        %v1123 = vld [vmem:[%s6] sm:$0x1]
        %v1125 = vlaneseq
        %v1126 = vshrl.u32 %v1125, 7
        %v1127 = vsub.s32 0, %v1126
        %v1128 = vrot.slane %v1123, %v1127
        %v1134 = vunpack.c.l.b16 %v1119
        %v1135 = vunpack.c.l.b16 %v1120
        %v1136 = vunpack.c.l.b16 %v1121
        %v1137 = vunpack.c.l.b16 %v1122
        %v1138 = vpack.c.b16 %v1135, %v1134
        %v1139 = vpack.c.b16 %v1137, %v1136
        %v1143 = vsel %vm445, %v1118, 0
        %1145 = vmatprep.subr.bf16.mxu0 0
        %1146 = vmatpush1.bf16.msra.mxu0 %v1138
        %1147 = vmatprep.subr.bf16.mxu0 0
        %1148 = vmatpush1.bf16.msra.mxu0 %v1139
        %1149 = vmatprep.subr.bf16.mxu0 0
        %1150 = vmatpush1.bf16.msra.mxu0 0
        %1151 = vmatprep.subr.bf16.mxu0 0
        %1152 = vmatpush1.bf16.msra.mxu0 0
        %1153 = vmatprep.subr.bf16.mxu0 0
        %1154 = vmatpush1.bf16.msra.mxu0 0
        %1155 = vmatprep.subr.bf16.mxu0 0
        %1156 = vmatpush1.bf16.msra.mxu0 0
        %1157 = vmatprep.subr.bf16.mxu0 0
        %1158 = vmatpush1.bf16.msra.mxu0 0
        %1159 = vmatprep.subr.bf16.mxu0 0
        %1160 = vmatpush1.bf16.msra.mxu0 0
        %1161 = vmatprep.subr.bf16.mxu0 0
        %1162 = vmatpush1.bf16.msra.mxu0 0
        %1163 = vmatprep.subr.bf16.mxu0 0
        %1164 = vmatpush1.bf16.msra.mxu0 0
        %1165 = vmatprep.subr.bf16.mxu0 0
        %1166 = vmatpush1.bf16.msra.mxu0 0
        %1167 = vmatprep.subr.bf16.mxu0 0
        %1168 = vmatpush1.bf16.msra.mxu0 0
        %1169 = vmatprep.subr.bf16.mxu0 0
        %1170 = vmatpush1.bf16.msra.mxu0 0
        %1171 = vmatprep.subr.bf16.mxu0 0
        %1172 = vmatpush1.bf16.msra.mxu0 0
        %1173 = vmatprep.subr.bf16.mxu0 0
        %1174 = vmatpush1.bf16.msra.mxu0 0
        %1175 = vmatprep.subr.bf16.mxu0 0
        %1176 = vmatpush1.bf16.msra.mxu0 0
        %1177 = vmatprep.mubr.bf16.mxu0 0
        %1178 = vmatmul.mubr.bf16.gmra.mrb[0].mxu0 %v1143
        %v1179 = vpop.f32.mrb[0].mxu0
        %v1180 = vadd.f32 %v1128, %v1179
        %v1181 = vpop.f32.mrb[0].mxu0
        %v1182 = vpop.f32.mrb[0].mxu0
        %v1183 = vpop.f32.mrb[0].mxu0
        %1184 = vdwg.mxu0
        %v1185 = vmax.f32 %v1180, 0.0
        %v1186 = vpack.c.bf16 %v1185, %v1185
        %v1187 = vld [vmem:[%s7] sm:$0xf]
        %v1188 = vld [vmem:[%s7 + $0x4] sm:$0xf]
        %v1189 = vld [vmem:[%s7 + $0x8] sm:$0xf]
        %v1190 = vld [vmem:[%s7 + $0xc] sm:$0xf]
        %v1191 = vld [vmem:[%s7 + $0x10] sm:$0xf]
        %v1192 = vld [vmem:[%s7 + $0x14] sm:$0xf]
        %v1193 = vld [vmem:[%s7 + $0x18] sm:$0xf]
        %v1194 = vld [vmem:[%s7 + $0x1c] sm:$0xf]
        %v1195 = vld [vmem:[%s7 + $0x20] sm:$0xf]
        %v1196 = vld [vmem:[%s7 + $0x24] sm:$0xf]
        %v1197 = vld [vmem:[%s7 + $0x28] sm:$0xf]
        %v1198 = vld [vmem:[%s7 + $0x2c] sm:$0xf]
        %v1199 = vld [vmem:[%s7 + $0x30] sm:$0xf]
        %v1200 = vld [vmem:[%s7 + $0x34] sm:$0xf]
        %v1201 = vld [vmem:[%s7 + $0x38] sm:$0xf]
        %v1202 = vld [vmem:[%s7 + $0x3c] sm:$0xf]
        %v1219 = vunpack.c.l.b16 %v1187
        %v1220 = vunpack.c.l.b16 %v1188
        %v1221 = vunpack.c.l.b16 %v1189
        %v1222 = vunpack.c.l.b16 %v1190
        %v1223 = vunpack.c.l.b16 %v1191
        %v1224 = vunpack.c.l.b16 %v1192
        %v1225 = vunpack.c.l.b16 %v1193
        %v1226 = vunpack.c.l.b16 %v1194
        %v1227 = vunpack.c.l.b16 %v1195
        %v1228 = vunpack.c.l.b16 %v1196
        %v1229 = vunpack.c.l.b16 %v1197
        %v1230 = vunpack.c.l.b16 %v1198
        %v1231 = vunpack.c.l.b16 %v1199
        %v1232 = vunpack.c.l.b16 %v1200
        %v1233 = vunpack.c.l.b16 %v1201
        %v1234 = vunpack.c.l.b16 %v1202
        %v1235 = vpack.c.b16 %v1220, %v1219
        %v1236 = vpack.c.b16 %v1222, %v1221
        %v1237 = vpack.c.b16 %v1224, %v1223
        %v1238 = vpack.c.b16 %v1226, %v1225
        %v1239 = vpack.c.b16 %v1228, %v1227
        %v1240 = vpack.c.b16 %v1230, %v1229
        %v1241 = vpack.c.b16 %v1232, %v1231
        %v1242 = vpack.c.b16 %v1234, %v1233
        %1251 = vmatprep.subr.bf16.mxu0 0
        %1252 = vmatpush1.bf16.msra.mxu0 %v1235
        %1253 = vmatprep.subr.bf16.mxu0 0
        %1254 = vmatpush1.bf16.msra.mxu0 %v1236
        %1255 = vmatprep.subr.bf16.mxu0 0
        %1256 = vmatpush1.bf16.msra.mxu0 %v1237
        %1257 = vmatprep.subr.bf16.mxu0 0
        %1258 = vmatpush1.bf16.msra.mxu0 %v1238
        %1259 = vmatprep.subr.bf16.mxu0 0
        %1260 = vmatpush1.bf16.msra.mxu0 %v1239
        %1261 = vmatprep.subr.bf16.mxu0 0
        %1262 = vmatpush1.bf16.msra.mxu0 %v1240
        %1263 = vmatprep.subr.bf16.mxu0 0
        %1264 = vmatpush1.bf16.msra.mxu0 %v1241
        %1265 = vmatprep.subr.bf16.mxu0 0
        %1266 = vmatpush1.bf16.msra.mxu0 %v1242
        %1267 = vmatprep.subr.bf16.mxu0 0
        %1268 = vmatpush1.bf16.msra.mxu0 0
        %1269 = vmatprep.subr.bf16.mxu0 0
        %1270 = vmatpush1.bf16.msra.mxu0 0
        %1271 = vmatprep.subr.bf16.mxu0 0
        %1272 = vmatpush1.bf16.msra.mxu0 0
        %1273 = vmatprep.subr.bf16.mxu0 0
        %1274 = vmatpush1.bf16.msra.mxu0 0
        %1275 = vmatprep.subr.bf16.mxu0 0
        %1276 = vmatpush1.bf16.msra.mxu0 0
        %1277 = vmatprep.subr.bf16.mxu0 0
        %1278 = vmatpush1.bf16.msra.mxu0 0
        %1279 = vmatprep.subr.bf16.mxu0 0
        %1280 = vmatpush1.bf16.msra.mxu0 0
        %1281 = vmatprep.subr.bf16.mxu0 0
        %1282 = vmatpush1.bf16.msra.mxu0 0
        %1283 = vmatprep.mubr.bf16.mxu0 0
        %1284 = vmatmul.mubr.bf16.gmra.mrb[0].mxu0 %v1186
        %v1285 = vpop.f32.mrb[0].mxu0
        %v1286 = vadd.f32 0.0, %v1285
        %v1287 = vpop.f32.mrb[0].mxu0
        %v1288 = vpop.f32.mrb[0].mxu0
        %v1289 = vpop.f32.mrb[0].mxu0
        %1290 = vdwg.mxu0
        %v1291 = vadd.f32 %v1083, %v1286
        %v1293 = vlaneseq
        %v1294 = vshrl.u32 %v1293, 7
        %v1295 = vsub.s32 0, %v1294
        %v1296 = vrot.slane %v444, %v1295
        %v1298 = vadd.f32 %v1291, %v1296
        %v1299 = vlaneseq
        %vm1300 = vcmp.ge.s32.totalorder %v1299, 0
        %vm1301 = vcmp.lt.s32.totalorder %v1299, 32
        %vm1302 = vmand %vm1300, %vm1301
        %1303 = vst.msk [vmem:[%s431] sm:$0x1] %vm1302, %v1298
        %v1306 = vunpack.c.l.s4 1966171168
        %v1307 = vunpack.c.0.s8 %v1306
        %v1308 = vlaneseq
        %v1309 = vshrl.u32 %v1308, 7
        %v1310 = vsub.s32 %v1307, %v1309
        %v1311 = vrot.slane %v1298, %v1310
        %v1312 = vcombine.high %v1311, %v1311
        %v1314 = vunpack.c.l.s4 1966171168
        %v1315 = vunpack.c.0.s8 %v1314
        %v1316 = vlaneseq
        %v1317 = vshrl.u32 %v1316, 7
        %v1318 = vsub.s32 %v1315, %v1317
        %v1319 = vrot.slane %v1311, %v1318
        %v1321 = vunpack.c.l.s4 1966171168
        %v1322 = vunpack.c.0.s8 %v1321
        %v1323 = vlaneseq
        %v1324 = vshrl.u32 %v1323, 7
        %v1325 = vsub.s32 %v1322, %v1324
        %v1326 = vrot.slane %v1312, %v1325
        %1327 = vrot.lane.b32.xlu0 %v1326, 32
        %v1328 = vpop.permute.xlu0 %1327
        %vm1330 = vcmp.ge.s32.totalorder %v1299, 32
        %vm1331 = vcmp.lt.s32.totalorder %v1299, 64
        %vm1332 = vmand %vm1330, %vm1331
        %1333 = vst.msk [vmem:[%s431] sm:$0x1] %vm1332, %v1328
        %v1334 = vcombine.high %v1319, %v1319
        %1335 = vrot.lane.b32.xlu0 %v1334, 64
        %v1336 = vpop.permute.xlu0 %1335
        %vm1338 = vcmp.ge.s32.totalorder %v1299, 64
        %vm1339 = vcmp.lt.s32.totalorder %v1299, 96
        %vm1340 = vmand %vm1338, %vm1339
        %1341 = vst.msk [vmem:[%s431] sm:$0x1] %vm1340, %v1336
        %v1342 = vcombine.high %v1326, %v1326
        %1343 = vrot.lane.b32.xlu0 %v1342, 96
        %v1344 = vpop.permute.xlu0 %1343
        %vm1346 = vcmp.ge.s32.totalorder %v1299, 96
        %vm1347 = vcmp.lt.s32.totalorder %v1299, 128
        %vm1348 = vmand %vm1346, %vm1347
        %1349 = vst.msk [vmem:[%s431] sm:$0x1] %vm1348, %v1344
        %v1350 = vcombine.high %v1298, %v1298
        %v1352 = vunpack.c.l.s4 1966171168
        %v1353 = vunpack.c.0.s8 %v1352
        %v1354 = vlaneseq
        %v1355 = vshrl.u32 %v1354, 7
        %v1356 = vsub.s32 %v1353, %v1355
        %v1357 = vrot.slane %v1350, %v1356
        %v1359 = vunpack.c.l.s4 1966171168
        %v1360 = vunpack.c.0.s8 %v1359
        %v1361 = vlaneseq
        %v1362 = vshrl.u32 %v1361, 7
        %v1363 = vsub.s32 %v1360, %v1362
        %v1364 = vrot.slane %v1357, %v1363
        %1366 = vst.msk [vmem:[%s431 + $0x1] sm:$0x1] %vm1302, %v1364
        %v1367 = vcombine.high %v1357, %v1357
        %v1369 = vunpack.c.l.s4 1966171168
        %v1370 = vunpack.c.0.s8 %v1369
        %v1371 = vlaneseq
        %v1372 = vshrl.u32 %v1371, 7
        %v1373 = vsub.s32 %v1370, %v1372
        %v1374 = vrot.slane %v1367, %v1373
        %1375 = vrot.lane.b32.xlu0 %v1374, 32
        %v1376 = vpop.permute.xlu0 %1375
        %1378 = vst.msk [vmem:[%s431 + $0x1] sm:$0x1] %vm1332, %v1376
        %v1379 = vcombine.high %v1364, %v1364
        %1380 = vrot.lane.b32.xlu0 %v1379, 64
        %v1381 = vpop.permute.xlu0 %1380
        %1383 = vst.msk [vmem:[%s431 + $0x1] sm:$0x1] %vm1340, %v1381
        %v1384 = vcombine.high %v1374, %v1374
        %1385 = vrot.lane.b32.xlu0 %v1384, 96
        %v1386 = vpop.permute.xlu0 %1385
        %1388 = vst.msk [vmem:[%s431 + $0x1] sm:$0x1] %vm1348, %v1386
        %s1389 = sand.u32 %s313, 1
        %s1390 = scalar_lea.sflag [#allocation3], %s1389
        %s1391 = sand.u32 %s313, 1
        %s1392 = smul.addr %s1391, 2
        %s1393 = scalar_lea.vmem [#allocation2], %s1392
        // Predicated region
        $region73: #{tpu_custom_call.1} parent=71 // pred_check
          %p1394 = pneg %p323
        $region74: #{tpu_custom_call.1} parent=71 // pred_check_branch
          %1396 = sbr.rel (%p1394) target = $region76
        $region75: #{tpu_custom_call.1} parent=71 // pred_region
          %s1398 = ssub.s32 32, 32
          %1399 = vsyncadd %s1390, %s1398
          %s1400 = smul.addr %s27, 2
          %s1401 = smul.addr %s1400, 16
          %s1402 = scalar_lea.hbm %s13, %s1401
          %s1404 = sshll.u32 %s1393, 4
          %s1405 = int_to_ptr.vmem [resolvable:$true] %s1404
          %1407 = dma.vmem_to_hbm [thread:$0]  %s1405, 32, %s1402, %s1390
        $region76: #{tpu_custom_call.1} parent=71 // pred_fallthru
          _
      $region72: #{tpu_custom_call.1} parent=5 // pred_fallthru
        _
      %p1408 = scmp.le.s32.totalorder 2, %s22
      // Predicated region
      $region77: #{tpu_custom_call.1} parent=5 // pred_check
        %p1409 = pneg %p1408
      $region78: #{tpu_custom_call.1} parent=5 // pred_check_branch
        %1411 = sbr.rel (%p1409) target = $region80
      $region79: #{tpu_custom_call.1} parent=5 // pred_region
        %s1412 = ssub.s32 %s22, 2
        // Predicated region
        $region81: #{tpu_custom_call.1} parent=79 // pred_check
          %p1413 = pneg %p329
        $region82: #{tpu_custom_call.1} parent=79 // pred_check_branch
          %1415 = sbr.rel (%p1413) target = $region84
        $region83: #{tpu_custom_call.1} parent=79 // pred_region
          %s1416 = sand.u32 %s314, 1
          %s1417 = scalar_lea.sflag [#allocation3], %s1416
          %s1418 = sand.u32 %s314, 1
          %s1419 = smul.addr %s1418, 2
          %s1420 = scalar_lea.vmem [#allocation2], %s1419
          %1421 = dma.done %s1417, 32
        $region84: #{tpu_custom_call.1} parent=79 // pred_fallthru
          _
      $region80: #{tpu_custom_call.1} parent=5 // pred_fallthru
        _
    $region6: #{tpu_custom_call.1} parent=1 // loop_footer
      %s26 = sadd.s32 1, %s22
    $region7: #{tpu_custom_call.1} parent=1 // loop_footer_branch
      %21 = sbr.rel target = $region3
    $region8: #{tpu_custom_call.1} parent=1 // loop_exit
      _
    %1422 = vsyncpa [#allocation3], 1
    %s1423 = scalar_lea.sflag [#allocation3], 1
    %1424 = vsyncpa %s1423, 1

</llo_original>
